<compile_context>
chip_gen: v5e
topology: v5e:2x2
jax: 0.10.0
libtpu: 0.0.40
codegen_flags: <defaults>
</compile_context>

<pallas_src>
import jax
import jax.numpy as jnp
import numpy as np
from jax.experimental import pallas as pl
from jax.experimental.pallas import tpu as pltpu


def _make_critic_kernel(seq, Bp, L, H):
    """Build the kernel body for static (seq, padded batch, layers, hidden)."""

    def kernel(*refs):
        # inputs : x_flat, h0, c0, [wih_l, whh_l, b_l]*L, w_hid, b_hid, w_val, b_val
        # outputs: value_flat, h_out, c_out
        # scratch: xproj0_sc (seq*Bp, 4H), y_sc (seq*Bp, H)
        x_ref, h0_ref, c0_ref = refs[0:3]
        layer_refs = refs[3:3 + 3 * L]
        w_hid_ref, b_hid_ref, w_val_ref, b_val_ref = refs[3 + 3 * L:7 + 3 * L]
        value_ref, h_out_ref, c_out_ref = refs[7 + 3 * L:10 + 3 * L]
        xproj0_sc, y_sc = refs[10 + 3 * L:12 + 3 * L]

        # Hoisted weight loads (live in vregs / re-loaded cheaply from VMEM).
        wih = [layer_refs[3 * l][...] for l in range(L)]
        whh = [layer_refs[3 * l + 1][...] for l in range(L)]
        bias = [layer_refs[3 * l + 2][...] for l in range(L)]

        # Layer-0 input projection batched over ALL timesteps: one big MXU pass
        # off the serial critical path.
        xproj0_sc[...] = (
            jnp.dot(x_ref[...], wih[0], preferred_element_type=jnp.float32)
            + bias[0]
        )  # (seq*Bp, 4H)

        h = [h0_ref[l] for l in range(L)]
        c = [c0_ref[l] for l in range(L)]

        H3 = 3 * H
        # Fully-unrolled wavefront: time-outer / layer-inner.  Layer l at step t
        # depends only on (layer l-1, step t) and (layer l, step t-1), so the
        # scheduler can overlap the layers' small matmuls and transcendentals.
        for t in range(seq):
            for l in range(L):
                if l == 0:
                    gates = xproj0_sc[pl.ds(t * Bp, Bp), :] + jnp.dot(
                        h[0], whh[0], preferred_element_type=jnp.float32)
                else:
                    gates = (
                        jnp.dot(h[l - 1], wih[l],
                                preferred_element_type=jnp.float32)
                        + bias[l]
                        + jnp.dot(h[l], whh[l],
                                  preferred_element_type=jnp.float32)
                    )
                # Gates pre-permuted to (i, f, o, g): one sigmoid over the
                # contiguous 3H lanes, one tanh over the last H lanes.
                sg = jax.nn.sigmoid(gates[:, :H3])
                g_g = jnp.tanh(gates[:, H3:])
                i_g = sg[:, 0:H]
                f_g = sg[:, H:2 * H]
                o_g = sg[:, 2 * H:H3]
                c_new = f_g * c[l] + i_g * g_g
                h_new = o_g * jnp.tanh(c_new)
                h[l] = h_new
                c[l] = c_new
            # Full-sublane-tile (Bp=8 rows) store of the top layer's output.
            y_sc[pl.ds(t * Bp, Bp), :] = h[L - 1]

        for l in range(L):
            h_out_ref[l] = h[l]
            c_out_ref[l] = c[l]

        # Heads (no time dependence): applied once over all seq*Bp rows.
        y = y_sc[...]                                             # (seq*Bp, H)
        hid = (jnp.dot(y, w_hid_ref[...], preferred_element_type=jnp.float32)
               + b_hid_ref[...])
        # ELU (alpha=1), overflow-safe on the unselected branch.
        hid = jnp.where(hid > 0, hid, jnp.exp(jnp.minimum(hid, 0.0)) - 1.0)
        # Value head: N=1 matmul replaced by VPU multiply + lane reduction.
        value_ref[...] = (
            jnp.sum(hid * w_val_ref[...], axis=-1, keepdims=True)
            + b_val_ref[...]
        )                                                         # (seq*Bp, 1)

    return kernel


def critic_forward(state, hidden, params, terminal=None):
    """Pallas implementation of Critic.forward.

    state:   (seq, B, state_dim) f32
    hidden:  tuple (h0, c0) each (L, B, H) f32
    params:  dict with per-layer transposed LSTM weights and head weights
             (PyTorch gate order i,f,g,o; permuted internally).
    terminal: optional (B,) f32; zeroes the carried hidden like PyTorch.
    """
    seq, B, D = state.shape
    h0, c0 = hidden
    L, _, H = h0.shape

    if terminal is not None:
        mask = (1.0 - terminal).reshape(1, B, 1).astype(h0.dtype)
        h0 = h0 * mask
        c0 = c0 * mask

    # Pad batch to the f32 sublane tile (8) so every per-timestep access inside
    # the kernel is an unmasked full-sublane-tile load/store.
    Bp = max(8, ((B + 7) // 8) * 8)
    if Bp != B:
        pad = [(0, 0), (0, Bp - B), (0, 0)]
        state_p = jnp.pad(state, pad)
        h0_p = jnp.pad(h0, pad)
        c0_p = jnp.pad(c0, pad)
    else:
        state_p, h0_p, c0_p = state, h0, c0

    # Flatten time/batch outside the kernel so batched matmuls are plain 2-D.
    x_flat = state_p.reshape(seq * Bp, D)

    # Permute gate columns from PyTorch (i,f,g,o) to (i,f,o,g) so the kernel
    # applies one sigmoid over a contiguous 3H slice and one tanh over H.
    def permute_gates(w):
        return jnp.concatenate(
            [w[..., 0:2 * H], w[..., 3 * H:4 * H], w[..., 2 * H:3 * H]],
            axis=-1)

    kernel = _make_critic_kernel(seq, Bp, L, H)

    args = [x_flat, h0_p, c0_p]
    for l in range(L):
        args += [permute_gates(params["wih"][l]),
                 permute_gates(params["whh"][l]),
                 permute_gates(params["b"][l])]
    args += [params["w_hid"], params["b_hid"],
             params["w_val"].reshape(1, H),   # row vector for VPU mul+reduce
             params["b_val"]]

    vmem = pltpu.MemorySpace.VMEM
    in_specs = [pl.BlockSpec(memory_space=vmem) for _ in args]
    out_specs = (
        pl.BlockSpec(memory_space=vmem),
        pl.BlockSpec(memory_space=vmem),
        pl.BlockSpec(memory_space=vmem),
    )
    out_shape = (
        jax.ShapeDtypeStruct((seq * Bp, 1), jnp.float32),  # value (flat)
        jax.ShapeDtypeStruct((L, Bp, H), jnp.float32),     # h_n
        jax.ShapeDtypeStruct((L, Bp, H), jnp.float32),     # c_n
    )

    value_flat, h_n, c_n = pl.pallas_call(
        kernel,
        out_shape=out_shape,
        in_specs=in_specs,
        out_specs=out_specs,
        scratch_shapes=[
            pltpu.VMEM((seq * Bp, 4 * H), jnp.float32),  # layer-0 gate proj
            pltpu.VMEM((seq * Bp, H), jnp.float32),      # top-layer outputs
        ],
        compiler_params=pltpu.CompilerParams(
            vmem_limit_bytes=32 * 1024 * 1024),
    )(*args)

    value = value_flat.reshape(seq, Bp, 1)[:, :B, :]
    return value, (h_n[:, :B, :], c_n[:, :B, :])


def init_params(key, state_dim, h, num_layers):
    """Deterministic init matching PyTorch shapes (weights stored transposed,
    PyTorch gate order i,f,g,o)."""
    params = {"wih": [], "whh": [], "b": []}
    bound = 1.0 / np.sqrt(h)
    for l in range(num_layers):
        in_dim = state_dim if l == 0 else h
        key, k1, k2, k3, k4 = jax.random.split(key, 5)
        w_ih = jax.random.uniform(k1, (4 * h, in_dim), jnp.float32, -bound, bound)
        w_hh = jax.random.uniform(k2, (4 * h, h), jnp.float32, -bound, bound)
        b_ih = jax.random.uniform(k3, (4 * h,), jnp.float32, -bound, bound)
        b_hh = jax.random.uniform(k4, (4 * h,), jnp.float32, -bound, bound)
        params["wih"].append(jnp.asarray(w_ih.T))            # (in_dim, 4h)
        params["whh"].append(jnp.asarray(w_hh.T))            # (h, 4h)
        params["b"].append((b_ih + b_hh).reshape(1, 4 * h))  # (1, 4h)
    key, k1, k2, k3, k4 = jax.random.split(key, 5)
    b_lin = 1.0 / np.sqrt(h)
    params["w_hid"] = jax.random.uniform(k1, (h, h), jnp.float32, -b_lin, b_lin)
    params["b_hid"] = jax.random.uniform(k2, (1, h), jnp.float32, -b_lin, b_lin)
    params["w_val"] = jax.random.uniform(k3, (h, 1), jnp.float32, -b_lin, b_lin)
    params["b_val"] = jax.random.uniform(k4, (1, 1), jnp.float32, -b_lin, b_lin)
    return params


def reference_forward(state, hidden, params, terminal=None):
    """Pure-JAX reference (mirrors PyTorch Critic.forward semantics)."""
    seq, B, D = state.shape
    h0, c0 = hidden
    L, _, H = h0.shape
    if terminal is not None:
        mask = (1.0 - terminal).reshape(1, B, 1)
        h0, c0 = h0 * mask, c0 * mask
    h = [h0[l] for l in range(L)]
    c = [c0[l] for l in range(L)]
    outs = []
    for t in range(seq):
        inp = state[t]
        for l in range(L):
            gates = inp @ params["wih"][l] + h[l] @ params["whh"][l] + params["b"][l]
            i_g = jax.nn.sigmoid(gates[:, 0 * H:1 * H])
            f_g = jax.nn.sigmoid(gates[:, 1 * H:2 * H])
            g_g = jnp.tanh(gates[:, 2 * H:3 * H])
            o_g = jax.nn.sigmoid(gates[:, 3 * H:4 * H])
            c[l] = f_g * c[l] + i_g * g_g
            h[l] = o_g * jnp.tanh(c[l])
            inp = h[l]
        hid = inp @ params["w_hid"] + params["b_hid"]
        hid = jnp.where(hid > 0, hid, jnp.exp(jnp.minimum(hid, 0.0)) - 1.0)
        outs.append(hid @ params["w_val"] + params["b_val"])
    return jnp.stack(outs, 0), (jnp.stack(h, 0), jnp.stack(c, 0))


if __name__ == "__main__":
    seq_len, batch, state_dim, h, recurrent_layers = 8, 4, 16, 32, 2

    key = jax.random.PRNGKey(0)
    kp, ks, kt = jax.random.split(key, 3)
    params = init_params(kp, state_dim, h, recurrent_layers)

    state = jax.random.normal(ks, (seq_len, batch, state_dim), jnp.float32)
    # get_init_state equivalent: zero hidden/cell
    h0 = jnp.zeros((recurrent_layers, batch, h), jnp.float32)
    c0 = jnp.zeros((recurrent_layers, batch, h), jnp.float32)
    terminal = (jax.random.uniform(kt, (batch,)) > 0.5).astype(jnp.float32)

    value, (h_n, c_n) = critic_forward(state, (h0, c0), params, terminal=terminal)
    jax.block_until_ready((value, h_n, c_n))

    v_ref, (h_ref, c_ref) = reference_forward(state, (h0, c0), params, terminal=terminal)
    np.testing.assert_allclose(np.asarray(value), np.asarray(v_ref), atol=1e-4, rtol=1e-4)
    np.testing.assert_allclose(np.asarray(h_n), np.asarray(h_ref), atol=1e-4, rtol=1e-4)
    np.testing.assert_allclose(np.asarray(c_n), np.asarray(c_ref), atol=1e-4, rtol=1e-4)

    print("KERNEL_OK")
</pallas_src>

<mosaic_0001>
module attributes {stable_mosaic.version = 11 : i64} {
  func.func @kernel(%arg0: memref<64x16xf32, #tpu.memory_space<vmem>>, %arg1: memref<2x8x32xf32, #tpu.memory_space<vmem>>, %arg2: memref<2x8x32xf32, #tpu.memory_space<vmem>>, %arg3: memref<16x128xf32, #tpu.memory_space<vmem>>, %arg4: memref<32x128xf32, #tpu.memory_space<vmem>>, %arg5: memref<1x128xf32, #tpu.memory_space<vmem>>, %arg6: memref<32x128xf32, #tpu.memory_space<vmem>>, %arg7: memref<32x128xf32, #tpu.memory_space<vmem>>, %arg8: memref<1x128xf32, #tpu.memory_space<vmem>>, %arg9: memref<32x32xf32, #tpu.memory_space<vmem>>, %arg10: memref<1x32xf32, #tpu.memory_space<vmem>>, %arg11: memref<1x32xf32, #tpu.memory_space<vmem>>, %arg12: memref<1x1xf32, #tpu.memory_space<vmem>>, %arg13: memref<64x1xf32, #tpu.memory_space<vmem>>, %arg14: memref<2x8x32xf32, #tpu.memory_space<vmem>>, %arg15: memref<2x8x32xf32, #tpu.memory_space<vmem>>, %arg16: memref<64x128xf32, #tpu.memory_space<vmem>>, %arg17: memref<64x32xf32, #tpu.memory_space<vmem>>) attributes {dimension_semantics = [], scalar_prefetch = 0 : i64, scratch_operands = 2 : i64, tpu.core_type = #tpu.core_type<tc>} {
    %c0 = arith.constant 0 : index
    %c0_0 = arith.constant 0 : index
    %0 = vector.load %arg3[%c0, %c0_0] : memref<16x128xf32, #tpu.memory_space<vmem>>, vector<16x128xf32>
    %c0_1 = arith.constant 0 : index
    %c0_2 = arith.constant 0 : index
    %1 = vector.load %arg6[%c0_1, %c0_2] : memref<32x128xf32, #tpu.memory_space<vmem>>, vector<32x128xf32>
    %c0_3 = arith.constant 0 : index
    %c0_4 = arith.constant 0 : index
    %2 = vector.load %arg4[%c0_3, %c0_4] : memref<32x128xf32, #tpu.memory_space<vmem>>, vector<32x128xf32>
    %c0_5 = arith.constant 0 : index
    %c0_6 = arith.constant 0 : index
    %3 = vector.load %arg7[%c0_5, %c0_6] : memref<32x128xf32, #tpu.memory_space<vmem>>, vector<32x128xf32>
    %c0_7 = arith.constant 0 : index
    %c0_8 = arith.constant 0 : index
    %4 = vector.load %arg5[%c0_7, %c0_8] : memref<1x128xf32, #tpu.memory_space<vmem>>, vector<1x128xf32>
    %c0_9 = arith.constant 0 : index
    %c0_10 = arith.constant 0 : index
    %5 = vector.load %arg8[%c0_9, %c0_10] : memref<1x128xf32, #tpu.memory_space<vmem>>, vector<1x128xf32>
    %c0_11 = arith.constant 0 : index
    %c0_12 = arith.constant 0 : index
    %6 = vector.load %arg0[%c0_11, %c0_12] : memref<64x16xf32, #tpu.memory_space<vmem>>, vector<64x16xf32>
    %cst = arith.constant dense<0.000000e+00> : vector<64x128xf32>
    %7 = tpu.matmul %6, %0, %cst {dimension_numbers = #tpu.dot_dimension_numbers<[1], [0], [0], [1], [0, 0, 1, 1], [], []>} : vector<64x16xf32>, vector<16x128xf32>, vector<64x128xf32> -> vector<64x128xf32>
    %8 = vector.broadcast %4 : vector<1x128xf32> to vector<64x128xf32>
    %9 = arith.addf %7, %8 : vector<64x128xf32>
    %c0_13 = arith.constant 0 : index
    %c0_14 = arith.constant 0 : index
    %10 = vector.load %arg16[%c0_13, %c0_14] : memref<64x128xf32, #tpu.memory_space<vmem>>, vector<64x128xf32>
    tpu.vector_store %arg16[%c0_13, %c0_14], %9 {strides = array<i32>} : memref<64x128xf32, #tpu.memory_space<vmem>>, vector<64x128xf32>,
    %c0_15 = arith.constant 0 : index
    %c0_16 = arith.constant 0 : index
    %c0_17 = arith.constant 0 : index
    %11 = vector.load %arg1[%c0_15, %c0_16, %c0_17] : memref<2x8x32xf32, #tpu.memory_space<vmem>>, vector<1x8x32xf32>
    %12 = vector.shape_cast %11 : vector<1x8x32xf32> to vector<8x32xf32>
    %c1 = arith.constant 1 : index
    %c0_18 = arith.constant 0 : index
    %c0_19 = arith.constant 0 : index
    %13 = vector.load %arg1[%c1, %c0_18, %c0_19] : memref<2x8x32xf32, #tpu.memory_space<vmem>>, vector<1x8x32xf32>
    %14 = vector.shape_cast %13 : vector<1x8x32xf32> to vector<8x32xf32>
    %c0_20 = arith.constant 0 : index
    %c0_21 = arith.constant 0 : index
    %c0_22 = arith.constant 0 : index
    %15 = vector.load %arg2[%c0_20, %c0_21, %c0_22] : memref<2x8x32xf32, #tpu.memory_space<vmem>>, vector<1x8x32xf32>
    %16 = vector.shape_cast %15 : vector<1x8x32xf32> to vector<8x32xf32>
    %c1_23 = arith.constant 1 : index
    %c0_24 = arith.constant 0 : index
    %c0_25 = arith.constant 0 : index
    %17 = vector.load %arg2[%c1_23, %c0_24, %c0_25] : memref<2x8x32xf32, #tpu.memory_space<vmem>>, vector<1x8x32xf32>
    %18 = vector.shape_cast %17 : vector<1x8x32xf32> to vector<8x32xf32>
    %c0_26 = arith.constant 0 : index
    %c0_27 = arith.constant 0 : index
    %19 = vector.load %arg16[%c0_26, %c0_27] : memref<64x128xf32, #tpu.memory_space<vmem>>, vector<8x128xf32>
    %cst_28 = arith.constant dense<0.000000e+00> : vector<8x128xf32>
    %20 = tpu.matmul %12, %2, %cst_28 {dimension_numbers = #tpu.dot_dimension_numbers<[1], [0], [0], [1], [0, 0, 1, 1], [], []>} : vector<8x32xf32>, vector<32x128xf32>, vector<8x128xf32> -> vector<8x128xf32>
    %21 = arith.addf %19, %20 : vector<8x128xf32>
    %22 = vector.extract_strided_slice %21 {offsets = [0, 0], sizes = [8, 96], strides = [1, 1]} : vector<8x128xf32> to vector<8x96xf32>
    %23 = arith.negf %22 : vector<8x96xf32>
    %24 = math.exp %23 : vector<8x96xf32>
    %cst_29 = arith.constant 1.000000e+00 : f32
    %25 = vector.broadcast %cst_29 : f32 to vector<8x96xf32>
    %26 = arith.addf %25, %24 : vector<8x96xf32>
    %27 = arith.divf %25, %26 : vector<8x96xf32>
    %28 = vector.extract_strided_slice %21 {offsets = [0, 96], sizes = [8, 32], strides = [1, 1]} : vector<8x128xf32> to vector<8x32xf32>
    %29 = math.tanh %28 : vector<8x32xf32>
    %30 = vector.extract_strided_slice %27 {offsets = [0, 0], sizes = [8, 32], strides = [1, 1]} : vector<8x96xf32> to vector<8x32xf32>
    %31 = vector.extract_strided_slice %27 {offsets = [0, 32], sizes = [8, 32], strides = [1, 1]} : vector<8x96xf32> to vector<8x32xf32>
    %32 = vector.extract_strided_slice %27 {offsets = [0, 64], sizes = [8, 32], strides = [1, 1]} : vector<8x96xf32> to vector<8x32xf32>
    %33 = arith.mulf %31, %16 : vector<8x32xf32>
    %34 = arith.mulf %30, %29 : vector<8x32xf32>
    %35 = arith.addf %33, %34 : vector<8x32xf32>
    %36 = math.tanh %35 : vector<8x32xf32>
    %37 = arith.mulf %32, %36 : vector<8x32xf32>
    %cst_30 = arith.constant dense<0.000000e+00> : vector<8x128xf32>
    %38 = tpu.matmul %37, %1, %cst_30 {dimension_numbers = #tpu.dot_dimension_numbers<[1], [0], [0], [1], [0, 0, 1, 1], [], []>} : vector<8x32xf32>, vector<32x128xf32>, vector<8x128xf32> -> vector<8x128xf32>
    %39 = vector.broadcast %5 : vector<1x128xf32> to vector<8x128xf32>
    %40 = arith.addf %38, %39 : vector<8x128xf32>
    %cst_31 = arith.constant dense<0.000000e+00> : vector<8x128xf32>
    %41 = tpu.matmul %14, %3, %cst_31 {dimension_numbers = #tpu.dot_dimension_numbers<[1], [0], [0], [1], [0, 0, 1, 1], [], []>} : vector<8x32xf32>, vector<32x128xf32>, vector<8x128xf32> -> vector<8x128xf32>
    %42 = arith.addf %40, %41 : vector<8x128xf32>
    %43 = vector.extract_strided_slice %42 {offsets = [0, 0], sizes = [8, 96], strides = [1, 1]} : vector<8x128xf32> to vector<8x96xf32>
    %44 = arith.negf %43 : vector<8x96xf32>
    %45 = math.exp %44 : vector<8x96xf32>
    %cst_32 = arith.constant 1.000000e+00 : f32
    %46 = vector.broadcast %cst_32 : f32 to vector<8x96xf32>
    %47 = arith.addf %46, %45 : vector<8x96xf32>
    %48 = arith.divf %46, %47 : vector<8x96xf32>
    %49 = vector.extract_strided_slice %42 {offsets = [0, 96], sizes = [8, 32], strides = [1, 1]} : vector<8x128xf32> to vector<8x32xf32>
    %50 = math.tanh %49 : vector<8x32xf32>
    %51 = vector.extract_strided_slice %48 {offsets = [0, 0], sizes = [8, 32], strides = [1, 1]} : vector<8x96xf32> to vector<8x32xf32>
    %52 = vector.extract_strided_slice %48 {offsets = [0, 32], sizes = [8, 32], strides = [1, 1]} : vector<8x96xf32> to vector<8x32xf32>
    %53 = vector.extract_strided_slice %48 {offsets = [0, 64], sizes = [8, 32], strides = [1, 1]} : vector<8x96xf32> to vector<8x32xf32>
    %54 = arith.mulf %52, %18 : vector<8x32xf32>
    %55 = arith.mulf %51, %50 : vector<8x32xf32>
    %56 = arith.addf %54, %55 : vector<8x32xf32>
    %57 = math.tanh %56 : vector<8x32xf32>
    %58 = arith.mulf %53, %57 : vector<8x32xf32>
    %c0_33 = arith.constant 0 : index
    %c0_34 = arith.constant 0 : index
    %59 = vector.load %arg17[%c0_33, %c0_34] : memref<64x32xf32, #tpu.memory_space<vmem>>, vector<8x32xf32>
    tpu.vector_store %arg17[%c0_33, %c0_34], %58 {strides = array<i32>} : memref<64x32xf32, #tpu.memory_space<vmem>>, vector<8x32xf32>,
    %c8 = arith.constant 8 : index
    %c0_35 = arith.constant 0 : index
    %60 = vector.load %arg16[%c8, %c0_35] : memref<64x128xf32, #tpu.memory_space<vmem>>, vector<8x128xf32>
    %cst_36 = arith.constant dense<0.000000e+00> : vector<8x128xf32>
    %61 = tpu.matmul %37, %2, %cst_36 {dimension_numbers = #tpu.dot_dimension_numbers<[1], [0], [0], [1], [0, 0, 1, 1], [], []>} : vector<8x32xf32>, vector<32x128xf32>, vector<8x128xf32> -> vector<8x128xf32>
    %62 = arith.addf %60, %61 : vector<8x128xf32>
    %63 = vector.extract_strided_slice %62 {offsets = [0, 0], sizes = [8, 96], strides = [1, 1]} : vector<8x128xf32> to vector<8x96xf32>
    %64 = arith.negf %63 : vector<8x96xf32>
    %65 = math.exp %64 : vector<8x96xf32>
    %cst_37 = arith.constant 1.000000e+00 : f32
    %66 = vector.broadcast %cst_37 : f32 to vector<8x96xf32>
    %67 = arith.addf %66, %65 : vector<8x96xf32>
    %68 = arith.divf %66, %67 : vector<8x96xf32>
    %69 = vector.extract_strided_slice %62 {offsets = [0, 96], sizes = [8, 32], strides = [1, 1]} : vector<8x128xf32> to vector<8x32xf32>
    %70 = math.tanh %69 : vector<8x32xf32>
    %71 = vector.extract_strided_slice %68 {offsets = [0, 0], sizes = [8, 32], strides = [1, 1]} : vector<8x96xf32> to vector<8x32xf32>
    %72 = vector.extract_strided_slice %68 {offsets = [0, 32], sizes = [8, 32], strides = [1, 1]} : vector<8x96xf32> to vector<8x32xf32>
    %73 = vector.extract_strided_slice %68 {offsets = [0, 64], sizes = [8, 32], strides = [1, 1]} : vector<8x96xf32> to vector<8x32xf32>
    %74 = arith.mulf %72, %35 : vector<8x32xf32>
    %75 = arith.mulf %71, %70 : vector<8x32xf32>
    %76 = arith.addf %74, %75 : vector<8x32xf32>
    %77 = math.tanh %76 : vector<8x32xf32>
    %78 = arith.mulf %73, %77 : vector<8x32xf32>
    %cst_38 = arith.constant dense<0.000000e+00> : vector<8x128xf32>
    %79 = tpu.matmul %78, %1, %cst_38 {dimension_numbers = #tpu.dot_dimension_numbers<[1], [0], [0], [1], [0, 0, 1, 1], [], []>} : vector<8x32xf32>, vector<32x128xf32>, vector<8x128xf32> -> vector<8x128xf32>
    %80 = vector.broadcast %5 : vector<1x128xf32> to vector<8x128xf32>
    %81 = arith.addf %79, %80 : vector<8x128xf32>
    %cst_39 = arith.constant dense<0.000000e+00> : vector<8x128xf32>
    %82 = tpu.matmul %58, %3, %cst_39 {dimension_numbers = #tpu.dot_dimension_numbers<[1], [0], [0], [1], [0, 0, 1, 1], [], []>} : vector<8x32xf32>, vector<32x128xf32>, vector<8x128xf32> -> vector<8x128xf32>
    %83 = arith.addf %81, %82 : vector<8x128xf32>
    %84 = vector.extract_strided_slice %83 {offsets = [0, 0], sizes = [8, 96], strides = [1, 1]} : vector<8x128xf32> to vector<8x96xf32>
    %85 = arith.negf %84 : vector<8x96xf32>
    %86 = math.exp %85 : vector<8x96xf32>
    %cst_40 = arith.constant 1.000000e+00 : f32
    %87 = vector.broadcast %cst_40 : f32 to vector<8x96xf32>
    %88 = arith.addf %87, %86 : vector<8x96xf32>
    %89 = arith.divf %87, %88 : vector<8x96xf32>
    %90 = vector.extract_strided_slice %83 {offsets = [0, 96], sizes = [8, 32], strides = [1, 1]} : vector<8x128xf32> to vector<8x32xf32>
    %91 = math.tanh %90 : vector<8x32xf32>
    %92 = vector.extract_strided_slice %89 {offsets = [0, 0], sizes = [8, 32], strides = [1, 1]} : vector<8x96xf32> to vector<8x32xf32>
    %93 = vector.extract_strided_slice %89 {offsets = [0, 32], sizes = [8, 32], strides = [1, 1]} : vector<8x96xf32> to vector<8x32xf32>
    %94 = vector.extract_strided_slice %89 {offsets = [0, 64], sizes = [8, 32], strides = [1, 1]} : vector<8x96xf32> to vector<8x32xf32>
    %95 = arith.mulf %93, %56 : vector<8x32xf32>
    %96 = arith.mulf %92, %91 : vector<8x32xf32>
    %97 = arith.addf %95, %96 : vector<8x32xf32>
    %98 = math.tanh %97 : vector<8x32xf32>
    %99 = arith.mulf %94, %98 : vector<8x32xf32>
    %c8_41 = arith.constant 8 : index
    %c0_42 = arith.constant 0 : index
    %100 = vector.load %arg17[%c8_41, %c0_42] : memref<64x32xf32, #tpu.memory_space<vmem>>, vector<8x32xf32>
    tpu.vector_store %arg17[%c8_41, %c0_42], %99 {strides = array<i32>} : memref<64x32xf32, #tpu.memory_space<vmem>>, vector<8x32xf32>,
    %c16 = arith.constant 16 : index
    %c0_43 = arith.constant 0 : index
    %101 = vector.load %arg16[%c16, %c0_43] : memref<64x128xf32, #tpu.memory_space<vmem>>, vector<8x128xf32>
    %cst_44 = arith.constant dense<0.000000e+00> : vector<8x128xf32>
    %102 = tpu.matmul %78, %2, %cst_44 {dimension_numbers = #tpu.dot_dimension_numbers<[1], [0], [0], [1], [0, 0, 1, 1], [], []>} : vector<8x32xf32>, vector<32x128xf32>, vector<8x128xf32> -> vector<8x128xf32>
    %103 = arith.addf %101, %102 : vector<8x128xf32>
    %104 = vector.extract_strided_slice %103 {offsets = [0, 0], sizes = [8, 96], strides = [1, 1]} : vector<8x128xf32> to vector<8x96xf32>
    %105 = arith.negf %104 : vector<8x96xf32>
    %106 = math.exp %105 : vector<8x96xf32>
    %cst_45 = arith.constant 1.000000e+00 : f32
    %107 = vector.broadcast %cst_45 : f32 to vector<8x96xf32>
    %108 = arith.addf %107, %106 : vector<8x96xf32>
    %109 = arith.divf %107, %108 : vector<8x96xf32>
    %110 = vector.extract_strided_slice %103 {offsets = [0, 96], sizes = [8, 32], strides = [1, 1]} : vector<8x128xf32> to vector<8x32xf32>
    %111 = math.tanh %110 : vector<8x32xf32>
    %112 = vector.extract_strided_slice %109 {offsets = [0, 0], sizes = [8, 32], strides = [1, 1]} : vector<8x96xf32> to vector<8x32xf32>
    %113 = vector.extract_strided_slice %109 {offsets = [0, 32], sizes = [8, 32], strides = [1, 1]} : vector<8x96xf32> to vector<8x32xf32>
    %114 = vector.extract_strided_slice %109 {offsets = [0, 64], sizes = [8, 32], strides = [1, 1]} : vector<8x96xf32> to vector<8x32xf32>
    %115 = arith.mulf %113, %76 : vector<8x32xf32>
    %116 = arith.mulf %112, %111 : vector<8x32xf32>
    %117 = arith.addf %115, %116 : vector<8x32xf32>
    %118 = math.tanh %117 : vector<8x32xf32>
    %119 = arith.mulf %114, %118 : vector<8x32xf32>
    %cst_46 = arith.constant dense<0.000000e+00> : vector<8x128xf32>
    %120 = tpu.matmul %119, %1, %cst_46 {dimension_numbers = #tpu.dot_dimension_numbers<[1], [0], [0], [1], [0, 0, 1, 1], [], []>} : vector<8x32xf32>, vector<32x128xf32>, vector<8x128xf32> -> vector<8x128xf32>
    %121 = vector.broadcast %5 : vector<1x128xf32> to vector<8x128xf32>
    %122 = arith.addf %120, %121 : vector<8x128xf32>
    %cst_47 = arith.constant dense<0.000000e+00> : vector<8x128xf32>
    %123 = tpu.matmul %99, %3, %cst_47 {dimension_numbers = #tpu.dot_dimension_numbers<[1], [0], [0], [1], [0, 0, 1, 1], [], []>} : vector<8x32xf32>, vector<32x128xf32>, vector<8x128xf32> -> vector<8x128xf32>
    %124 = arith.addf %122, %123 : vector<8x128xf32>
    %125 = vector.extract_strided_slice %124 {offsets = [0, 0], sizes = [8, 96], strides = [1, 1]} : vector<8x128xf32> to vector<8x96xf32>
    %126 = arith.negf %125 : vector<8x96xf32>
    %127 = math.exp %126 : vector<8x96xf32>
    %cst_48 = arith.constant 1.000000e+00 : f32
    %128 = vector.broadcast %cst_48 : f32 to vector<8x96xf32>
    %129 = arith.addf %128, %127 : vector<8x96xf32>
    %130 = arith.divf %128, %129 : vector<8x96xf32>
    %131 = vector.extract_strided_slice %124 {offsets = [0, 96], sizes = [8, 32], strides = [1, 1]} : vector<8x128xf32> to vector<8x32xf32>
    %132 = math.tanh %131 : vector<8x32xf32>
    %133 = vector.extract_strided_slice %130 {offsets = [0, 0], sizes = [8, 32], strides = [1, 1]} : vector<8x96xf32> to vector<8x32xf32>
    %134 = vector.extract_strided_slice %130 {offsets = [0, 32], sizes = [8, 32], strides = [1, 1]} : vector<8x96xf32> to vector<8x32xf32>
    %135 = vector.extract_strided_slice %130 {offsets = [0, 64], sizes = [8, 32], strides = [1, 1]} : vector<8x96xf32> to vector<8x32xf32>
    %136 = arith.mulf %134, %97 : vector<8x32xf32>
    %137 = arith.mulf %133, %132 : vector<8x32xf32>
    %138 = arith.addf %136, %137 : vector<8x32xf32>
    %139 = math.tanh %138 : vector<8x32xf32>
    %140 = arith.mulf %135, %139 : vector<8x32xf32>
    %c16_49 = arith.constant 16 : index
    %c0_50 = arith.constant 0 : index
    %141 = vector.load %arg17[%c16_49, %c0_50] : memref<64x32xf32, #tpu.memory_space<vmem>>, vector<8x32xf32>
    tpu.vector_store %arg17[%c16_49, %c0_50], %140 {strides = array<i32>} : memref<64x32xf32, #tpu.memory_space<vmem>>, vector<8x32xf32>,
    %c24 = arith.constant 24 : index
    %c0_51 = arith.constant 0 : index
    %142 = vector.load %arg16[%c24, %c0_51] : memref<64x128xf32, #tpu.memory_space<vmem>>, vector<8x128xf32>
    %cst_52 = arith.constant dense<0.000000e+00> : vector<8x128xf32>
    %143 = tpu.matmul %119, %2, %cst_52 {dimension_numbers = #tpu.dot_dimension_numbers<[1], [0], [0], [1], [0, 0, 1, 1], [], []>} : vector<8x32xf32>, vector<32x128xf32>, vector<8x128xf32> -> vector<8x128xf32>
    %144 = arith.addf %142, %143 : vector<8x128xf32>
    %145 = vector.extract_strided_slice %144 {offsets = [0, 0], sizes = [8, 96], strides = [1, 1]} : vector<8x128xf32> to vector<8x96xf32>
    %146 = arith.negf %145 : vector<8x96xf32>
    %147 = math.exp %146 : vector<8x96xf32>
    %cst_53 = arith.constant 1.000000e+00 : f32
    %148 = vector.broadcast %cst_53 : f32 to vector<8x96xf32>
    %149 = arith.addf %148, %147 : vector<8x96xf32>
    %150 = arith.divf %148, %149 : vector<8x96xf32>
    %151 = vector.extract_strided_slice %144 {offsets = [0, 96], sizes = [8, 32], strides = [1, 1]} : vector<8x128xf32> to vector<8x32xf32>
    %152 = math.tanh %151 : vector<8x32xf32>
    %153 = vector.extract_strided_slice %150 {offsets = [0, 0], sizes = [8, 32], strides = [1, 1]} : vector<8x96xf32> to vector<8x32xf32>
    %154 = vector.extract_strided_slice %150 {offsets = [0, 32], sizes = [8, 32], strides = [1, 1]} : vector<8x96xf32> to vector<8x32xf32>
    %155 = vector.extract_strided_slice %150 {offsets = [0, 64], sizes = [8, 32], strides = [1, 1]} : vector<8x96xf32> to vector<8x32xf32>
    %156 = arith.mulf %154, %117 : vector<8x32xf32>
    %157 = arith.mulf %153, %152 : vector<8x32xf32>
    %158 = arith.addf %156, %157 : vector<8x32xf32>
    %159 = math.tanh %158 : vector<8x32xf32>
    %160 = arith.mulf %155, %159 : vector<8x32xf32>
    %cst_54 = arith.constant dense<0.000000e+00> : vector<8x128xf32>
    %161 = tpu.matmul %160, %1, %cst_54 {dimension_numbers = #tpu.dot_dimension_numbers<[1], [0], [0], [1], [0, 0, 1, 1], [], []>} : vector<8x32xf32>, vector<32x128xf32>, vector<8x128xf32> -> vector<8x128xf32>
    %162 = vector.broadcast %5 : vector<1x128xf32> to vector<8x128xf32>
    %163 = arith.addf %161, %162 : vector<8x128xf32>
    %cst_55 = arith.constant dense<0.000000e+00> : vector<8x128xf32>
    %164 = tpu.matmul %140, %3, %cst_55 {dimension_numbers = #tpu.dot_dimension_numbers<[1], [0], [0], [1], [0, 0, 1, 1], [], []>} : vector<8x32xf32>, vector<32x128xf32>, vector<8x128xf32> -> vector<8x128xf32>
    %165 = arith.addf %163, %164 : vector<8x128xf32>
    %166 = vector.extract_strided_slice %165 {offsets = [0, 0], sizes = [8, 96], strides = [1, 1]} : vector<8x128xf32> to vector<8x96xf32>
    %167 = arith.negf %166 : vector<8x96xf32>
    %168 = math.exp %167 : vector<8x96xf32>
    %cst_56 = arith.constant 1.000000e+00 : f32
    %169 = vector.broadcast %cst_56 : f32 to vector<8x96xf32>
    %170 = arith.addf %169, %168 : vector<8x96xf32>
    %171 = arith.divf %169, %170 : vector<8x96xf32>
    %172 = vector.extract_strided_slice %165 {offsets = [0, 96], sizes = [8, 32], strides = [1, 1]} : vector<8x128xf32> to vector<8x32xf32>
    %173 = math.tanh %172 : vector<8x32xf32>
    %174 = vector.extract_strided_slice %171 {offsets = [0, 0], sizes = [8, 32], strides = [1, 1]} : vector<8x96xf32> to vector<8x32xf32>
    %175 = vector.extract_strided_slice %171 {offsets = [0, 32], sizes = [8, 32], strides = [1, 1]} : vector<8x96xf32> to vector<8x32xf32>
    %176 = vector.extract_strided_slice %171 {offsets = [0, 64], sizes = [8, 32], strides = [1, 1]} : vector<8x96xf32> to vector<8x32xf32>
    %177 = arith.mulf %175, %138 : vector<8x32xf32>
    %178 = arith.mulf %174, %173 : vector<8x32xf32>
    %179 = arith.addf %177, %178 : vector<8x32xf32>
    %180 = math.tanh %179 : vector<8x32xf32>
    %181 = arith.mulf %176, %180 : vector<8x32xf32>
    %c24_57 = arith.constant 24 : index
    %c0_58 = arith.constant 0 : index
    %182 = vector.load %arg17[%c24_57, %c0_58] : memref<64x32xf32, #tpu.memory_space<vmem>>, vector<8x32xf32>
    tpu.vector_store %arg17[%c24_57, %c0_58], %181 {strides = array<i32>} : memref<64x32xf32, #tpu.memory_space<vmem>>, vector<8x32xf32>,
    %c32 = arith.constant 32 : index
    %c0_59 = arith.constant 0 : index
    %183 = vector.load %arg16[%c32, %c0_59] : memref<64x128xf32, #tpu.memory_space<vmem>>, vector<8x128xf32>
    %cst_60 = arith.constant dense<0.000000e+00> : vector<8x128xf32>
    %184 = tpu.matmul %160, %2, %cst_60 {dimension_numbers = #tpu.dot_dimension_numbers<[1], [0], [0], [1], [0, 0, 1, 1], [], []>} : vector<8x32xf32>, vector<32x128xf32>, vector<8x128xf32> -> vector<8x128xf32>
    %185 = arith.addf %183, %184 : vector<8x128xf32>
    %186 = vector.extract_strided_slice %185 {offsets = [0, 0], sizes = [8, 96], strides = [1, 1]} : vector<8x128xf32> to vector<8x96xf32>
    %187 = arith.negf %186 : vector<8x96xf32>
    %188 = math.exp %187 : vector<8x96xf32>
    %cst_61 = arith.constant 1.000000e+00 : f32
    %189 = vector.broadcast %cst_61 : f32 to vector<8x96xf32>
    %190 = arith.addf %189, %188 : vector<8x96xf32>
    %191 = arith.divf %189, %190 : vector<8x96xf32>
    %192 = vector.extract_strided_slice %185 {offsets = [0, 96], sizes = [8, 32], strides = [1, 1]} : vector<8x128xf32> to vector<8x32xf32>
    %193 = math.tanh %192 : vector<8x32xf32>
    %194 = vector.extract_strided_slice %191 {offsets = [0, 0], sizes = [8, 32], strides = [1, 1]} : vector<8x96xf32> to vector<8x32xf32>
    %195 = vector.extract_strided_slice %191 {offsets = [0, 32], sizes = [8, 32], strides = [1, 1]} : vector<8x96xf32> to vector<8x32xf32>
    %196 = vector.extract_strided_slice %191 {offsets = [0, 64], sizes = [8, 32], strides = [1, 1]} : vector<8x96xf32> to vector<8x32xf32>
    %197 = arith.mulf %195, %158 : vector<8x32xf32>
    %198 = arith.mulf %194, %193 : vector<8x32xf32>
    %199 = arith.addf %197, %198 : vector<8x32xf32>
    %200 = math.tanh %199 : vector<8x32xf32>
    %201 = arith.mulf %196, %200 : vector<8x32xf32>
    %cst_62 = arith.constant dense<0.000000e+00> : vector<8x128xf32>
    %202 = tpu.matmul %201, %1, %cst_62 {dimension_numbers = #tpu.dot_dimension_numbers<[1], [0], [0], [1], [0, 0, 1, 1], [], []>} : vector<8x32xf32>, vector<32x128xf32>, vector<8x128xf32> -> vector<8x128xf32>
    %203 = vector.broadcast %5 : vector<1x128xf32> to vector<8x128xf32>
    %204 = arith.addf %202, %203 : vector<8x128xf32>
    %cst_63 = arith.constant dense<0.000000e+00> : vector<8x128xf32>
    %205 = tpu.matmul %181, %3, %cst_63 {dimension_numbers = #tpu.dot_dimension_numbers<[1], [0], [0], [1], [0, 0, 1, 1], [], []>} : vector<8x32xf32>, vector<32x128xf32>, vector<8x128xf32> -> vector<8x128xf32>
    %206 = arith.addf %204, %205 : vector<8x128xf32>
    %207 = vector.extract_strided_slice %206 {offsets = [0, 0], sizes = [8, 96], strides = [1, 1]} : vector<8x128xf32> to vector<8x96xf32>
    %208 = arith.negf %207 : vector<8x96xf32>
    %209 = math.exp %208 : vector<8x96xf32>
    %cst_64 = arith.constant 1.000000e+00 : f32
    %210 = vector.broadcast %cst_64 : f32 to vector<8x96xf32>
    %211 = arith.addf %210, %209 : vector<8x96xf32>
    %212 = arith.divf %210, %211 : vector<8x96xf32>
    %213 = vector.extract_strided_slice %206 {offsets = [0, 96], sizes = [8, 32], strides = [1, 1]} : vector<8x128xf32> to vector<8x32xf32>
    %214 = math.tanh %213 : vector<8x32xf32>
    %215 = vector.extract_strided_slice %212 {offsets = [0, 0], sizes = [8, 32], strides = [1, 1]} : vector<8x96xf32> to vector<8x32xf32>
    %216 = vector.extract_strided_slice %212 {offsets = [0, 32], sizes = [8, 32], strides = [1, 1]} : vector<8x96xf32> to vector<8x32xf32>
    %217 = vector.extract_strided_slice %212 {offsets = [0, 64], sizes = [8, 32], strides = [1, 1]} : vector<8x96xf32> to vector<8x32xf32>
    %218 = arith.mulf %216, %179 : vector<8x32xf32>
    %219 = arith.mulf %215, %214 : vector<8x32xf32>
    %220 = arith.addf %218, %219 : vector<8x32xf32>
    %221 = math.tanh %220 : vector<8x32xf32>
    %222 = arith.mulf %217, %221 : vector<8x32xf32>
    %c32_65 = arith.constant 32 : index
    %c0_66 = arith.constant 0 : index
    %223 = vector.load %arg17[%c32_65, %c0_66] : memref<64x32xf32, #tpu.memory_space<vmem>>, vector<8x32xf32>
    tpu.vector_store %arg17[%c32_65, %c0_66], %222 {strides = array<i32>} : memref<64x32xf32, #tpu.memory_space<vmem>>, vector<8x32xf32>,
    %c40 = arith.constant 40 : index
    %c0_67 = arith.constant 0 : index
    %224 = vector.load %arg16[%c40, %c0_67] : memref<64x128xf32, #tpu.memory_space<vmem>>, vector<8x128xf32>
    %cst_68 = arith.constant dense<0.000000e+00> : vector<8x128xf32>
    %225 = tpu.matmul %201, %2, %cst_68 {dimension_numbers = #tpu.dot_dimension_numbers<[1], [0], [0], [1], [0, 0, 1, 1], [], []>} : vector<8x32xf32>, vector<32x128xf32>, vector<8x128xf32> -> vector<8x128xf32>
    %226 = arith.addf %224, %225 : vector<8x128xf32>
    %227 = vector.extract_strided_slice %226 {offsets = [0, 0], sizes = [8, 96], strides = [1, 1]} : vector<8x128xf32> to vector<8x96xf32>
    %228 = arith.negf %227 : vector<8x96xf32>
    %229 = math.exp %228 : vector<8x96xf32>
    %cst_69 = arith.constant 1.000000e+00 : f32
    %230 = vector.broadcast %cst_69 : f32 to vector<8x96xf32>
    %231 = arith.addf %230, %229 : vector<8x96xf32>
    %232 = arith.divf %230, %231 : vector<8x96xf32>
    %233 = vector.extract_strided_slice %226 {offsets = [0, 96], sizes = [8, 32], strides = [1, 1]} : vector<8x128xf32> to vector<8x32xf32>
    %234 = math.tanh %233 : vector<8x32xf32>
    %235 = vector.extract_strided_slice %232 {offsets = [0, 0], sizes = [8, 32], strides = [1, 1]} : vector<8x96xf32> to vector<8x32xf32>
    %236 = vector.extract_strided_slice %232 {offsets = [0, 32], sizes = [8, 32], strides = [1, 1]} : vector<8x96xf32> to vector<8x32xf32>
    %237 = vector.extract_strided_slice %232 {offsets = [0, 64], sizes = [8, 32], strides = [1, 1]} : vector<8x96xf32> to vector<8x32xf32>
    %238 = arith.mulf %236, %199 : vector<8x32xf32>
    %239 = arith.mulf %235, %234 : vector<8x32xf32>
    %240 = arith.addf %238, %239 : vector<8x32xf32>
    %241 = math.tanh %240 : vector<8x32xf32>
    %242 = arith.mulf %237, %241 : vector<8x32xf32>
    %cst_70 = arith.constant dense<0.000000e+00> : vector<8x128xf32>
    %243 = tpu.matmul %242, %1, %cst_70 {dimension_numbers = #tpu.dot_dimension_numbers<[1], [0], [0], [1], [0, 0, 1, 1], [], []>} : vector<8x32xf32>, vector<32x128xf32>, vector<8x128xf32> -> vector<8x128xf32>
    %244 = vector.broadcast %5 : vector<1x128xf32> to vector<8x128xf32>
    %245 = arith.addf %243, %244 : vector<8x128xf32>
    %cst_71 = arith.constant dense<0.000000e+00> : vector<8x128xf32>
    %246 = tpu.matmul %222, %3, %cst_71 {dimension_numbers = #tpu.dot_dimension_numbers<[1], [0], [0], [1], [0, 0, 1, 1], [], []>} : vector<8x32xf32>, vector<32x128xf32>, vector<8x128xf32> -> vector<8x128xf32>
    %247 = arith.addf %245, %246 : vector<8x128xf32>
    %248 = vector.extract_strided_slice %247 {offsets = [0, 0], sizes = [8, 96], strides = [1, 1]} : vector<8x128xf32> to vector<8x96xf32>
    %249 = arith.negf %248 : vector<8x96xf32>
    %250 = math.exp %249 : vector<8x96xf32>
    %cst_72 = arith.constant 1.000000e+00 : f32
    %251 = vector.broadcast %cst_72 : f32 to vector<8x96xf32>
    %252 = arith.addf %251, %250 : vector<8x96xf32>
    %253 = arith.divf %251, %252 : vector<8x96xf32>
    %254 = vector.extract_strided_slice %247 {offsets = [0, 96], sizes = [8, 32], strides = [1, 1]} : vector<8x128xf32> to vector<8x32xf32>
    %255 = math.tanh %254 : vector<8x32xf32>
    %256 = vector.extract_strided_slice %253 {offsets = [0, 0], sizes = [8, 32], strides = [1, 1]} : vector<8x96xf32> to vector<8x32xf32>
    %257 = vector.extract_strided_slice %253 {offsets = [0, 32], sizes = [8, 32], strides = [1, 1]} : vector<8x96xf32> to vector<8x32xf32>
    %258 = vector.extract_strided_slice %253 {offsets = [0, 64], sizes = [8, 32], strides = [1, 1]} : vector<8x96xf32> to vector<8x32xf32>
    %259 = arith.mulf %257, %220 : vector<8x32xf32>
    %260 = arith.mulf %256, %255 : vector<8x32xf32>
    %261 = arith.addf %259, %260 : vector<8x32xf32>
    %262 = math.tanh %261 : vector<8x32xf32>
    %263 = arith.mulf %258, %262 : vector<8x32xf32>
    %c40_73 = arith.constant 40 : index
    %c0_74 = arith.constant 0 : index
    %264 = vector.load %arg17[%c40_73, %c0_74] : memref<64x32xf32, #tpu.memory_space<vmem>>, vector<8x32xf32>
    tpu.vector_store %arg17[%c40_73, %c0_74], %263 {strides = array<i32>} : memref<64x32xf32, #tpu.memory_space<vmem>>, vector<8x32xf32>,
    %c48 = arith.constant 48 : index
    %c0_75 = arith.constant 0 : index
    %265 = vector.load %arg16[%c48, %c0_75] : memref<64x128xf32, #tpu.memory_space<vmem>>, vector<8x128xf32>
    %cst_76 = arith.constant dense<0.000000e+00> : vector<8x128xf32>
    %266 = tpu.matmul %242, %2, %cst_76 {dimension_numbers = #tpu.dot_dimension_numbers<[1], [0], [0], [1], [0, 0, 1, 1], [], []>} : vector<8x32xf32>, vector<32x128xf32>, vector<8x128xf32> -> vector<8x128xf32>
    %267 = arith.addf %265, %266 : vector<8x128xf32>
    %268 = vector.extract_strided_slice %267 {offsets = [0, 0], sizes = [8, 96], strides = [1, 1]} : vector<8x128xf32> to vector<8x96xf32>
    %269 = arith.negf %268 : vector<8x96xf32>
    %270 = math.exp %269 : vector<8x96xf32>
    %cst_77 = arith.constant 1.000000e+00 : f32
    %271 = vector.broadcast %cst_77 : f32 to vector<8x96xf32>
    %272 = arith.addf %271, %270 : vector<8x96xf32>
    %273 = arith.divf %271, %272 : vector<8x96xf32>
    %274 = vector.extract_strided_slice %267 {offsets = [0, 96], sizes = [8, 32], strides = [1, 1]} : vector<8x128xf32> to vector<8x32xf32>
    %275 = math.tanh %274 : vector<8x32xf32>
    %276 = vector.extract_strided_slice %273 {offsets = [0, 0], sizes = [8, 32], strides = [1, 1]} : vector<8x96xf32> to vector<8x32xf32>
    %277 = vector.extract_strided_slice %273 {offsets = [0, 32], sizes = [8, 32], strides = [1, 1]} : vector<8x96xf32> to vector<8x32xf32>
    %278 = vector.extract_strided_slice %273 {offsets = [0, 64], sizes = [8, 32], strides = [1, 1]} : vector<8x96xf32> to vector<8x32xf32>
    %279 = arith.mulf %277, %240 : vector<8x32xf32>
    %280 = arith.mulf %276, %275 : vector<8x32xf32>
    %281 = arith.addf %279, %280 : vector<8x32xf32>
    %282 = math.tanh %281 : vector<8x32xf32>
    %283 = arith.mulf %278, %282 : vector<8x32xf32>
    %cst_78 = arith.constant dense<0.000000e+00> : vector<8x128xf32>
    %284 = tpu.matmul %283, %1, %cst_78 {dimension_numbers = #tpu.dot_dimension_numbers<[1], [0], [0], [1], [0, 0, 1, 1], [], []>} : vector<8x32xf32>, vector<32x128xf32>, vector<8x128xf32> -> vector<8x128xf32>
    %285 = vector.broadcast %5 : vector<1x128xf32> to vector<8x128xf32>
    %286 = arith.addf %284, %285 : vector<8x128xf32>
    %cst_79 = arith.constant dense<0.000000e+00> : vector<8x128xf32>
    %287 = tpu.matmul %263, %3, %cst_79 {dimension_numbers = #tpu.dot_dimension_numbers<[1], [0], [0], [1], [0, 0, 1, 1], [], []>} : vector<8x32xf32>, vector<32x128xf32>, vector<8x128xf32> -> vector<8x128xf32>
    %288 = arith.addf %286, %287 : vector<8x128xf32>
    %289 = vector.extract_strided_slice %288 {offsets = [0, 0], sizes = [8, 96], strides = [1, 1]} : vector<8x128xf32> to vector<8x96xf32>
    %290 = arith.negf %289 : vector<8x96xf32>
    %291 = math.exp %290 : vector<8x96xf32>
    %cst_80 = arith.constant 1.000000e+00 : f32
    %292 = vector.broadcast %cst_80 : f32 to vector<8x96xf32>
    %293 = arith.addf %292, %291 : vector<8x96xf32>
    %294 = arith.divf %292, %293 : vector<8x96xf32>
    %295 = vector.extract_strided_slice %288 {offsets = [0, 96], sizes = [8, 32], strides = [1, 1]} : vector<8x128xf32> to vector<8x32xf32>
    %296 = math.tanh %295 : vector<8x32xf32>
    %297 = vector.extract_strided_slice %294 {offsets = [0, 0], sizes = [8, 32], strides = [1, 1]} : vector<8x96xf32> to vector<8x32xf32>
    %298 = vector.extract_strided_slice %294 {offsets = [0, 32], sizes = [8, 32], strides = [1, 1]} : vector<8x96xf32> to vector<8x32xf32>
    %299 = vector.extract_strided_slice %294 {offsets = [0, 64], sizes = [8, 32], strides = [1, 1]} : vector<8x96xf32> to vector<8x32xf32>
    %300 = arith.mulf %298, %261 : vector<8x32xf32>
    %301 = arith.mulf %297, %296 : vector<8x32xf32>
    %302 = arith.addf %300, %301 : vector<8x32xf32>
    %303 = math.tanh %302 : vector<8x32xf32>
    %304 = arith.mulf %299, %303 : vector<8x32xf32>
    %c48_81 = arith.constant 48 : index
    %c0_82 = arith.constant 0 : index
    %305 = vector.load %arg17[%c48_81, %c0_82] : memref<64x32xf32, #tpu.memory_space<vmem>>, vector<8x32xf32>
    tpu.vector_store %arg17[%c48_81, %c0_82], %304 {strides = array<i32>} : memref<64x32xf32, #tpu.memory_space<vmem>>, vector<8x32xf32>,
    %c56 = arith.constant 56 : index
    %c0_83 = arith.constant 0 : index
    %306 = vector.load %arg16[%c56, %c0_83] : memref<64x128xf32, #tpu.memory_space<vmem>>, vector<8x128xf32>
    %cst_84 = arith.constant dense<0.000000e+00> : vector<8x128xf32>
    %307 = tpu.matmul %283, %2, %cst_84 {dimension_numbers = #tpu.dot_dimension_numbers<[1], [0], [0], [1], [0, 0, 1, 1], [], []>} : vector<8x32xf32>, vector<32x128xf32>, vector<8x128xf32> -> vector<8x128xf32>
    %308 = arith.addf %306, %307 : vector<8x128xf32>
    %309 = vector.extract_strided_slice %308 {offsets = [0, 0], sizes = [8, 96], strides = [1, 1]} : vector<8x128xf32> to vector<8x96xf32>
    %310 = arith.negf %309 : vector<8x96xf32>
    %311 = math.exp %310 : vector<8x96xf32>
    %cst_85 = arith.constant 1.000000e+00 : f32
    %312 = vector.broadcast %cst_85 : f32 to vector<8x96xf32>
    %313 = arith.addf %312, %311 : vector<8x96xf32>
    %314 = arith.divf %312, %313 : vector<8x96xf32>
    %315 = vector.extract_strided_slice %308 {offsets = [0, 96], sizes = [8, 32], strides = [1, 1]} : vector<8x128xf32> to vector<8x32xf32>
    %316 = math.tanh %315 : vector<8x32xf32>
    %317 = vector.extract_strided_slice %314 {offsets = [0, 0], sizes = [8, 32], strides = [1, 1]} : vector<8x96xf32> to vector<8x32xf32>
    %318 = vector.extract_strided_slice %314 {offsets = [0, 32], sizes = [8, 32], strides = [1, 1]} : vector<8x96xf32> to vector<8x32xf32>
    %319 = vector.extract_strided_slice %314 {offsets = [0, 64], sizes = [8, 32], strides = [1, 1]} : vector<8x96xf32> to vector<8x32xf32>
    %320 = arith.mulf %318, %281 : vector<8x32xf32>
    %321 = arith.mulf %317, %316 : vector<8x32xf32>
    %322 = arith.addf %320, %321 : vector<8x32xf32>
    %323 = math.tanh %322 : vector<8x32xf32>
    %324 = arith.mulf %319, %323 : vector<8x32xf32>
    %cst_86 = arith.constant dense<0.000000e+00> : vector<8x128xf32>
    %325 = tpu.matmul %324, %1, %cst_86 {dimension_numbers = #tpu.dot_dimension_numbers<[1], [0], [0], [1], [0, 0, 1, 1], [], []>} : vector<8x32xf32>, vector<32x128xf32>, vector<8x128xf32> -> vector<8x128xf32>
    %326 = vector.broadcast %5 : vector<1x128xf32> to vector<8x128xf32>
    %327 = arith.addf %325, %326 : vector<8x128xf32>
    %cst_87 = arith.constant dense<0.000000e+00> : vector<8x128xf32>
    %328 = tpu.matmul %304, %3, %cst_87 {dimension_numbers = #tpu.dot_dimension_numbers<[1], [0], [0], [1], [0, 0, 1, 1], [], []>} : vector<8x32xf32>, vector<32x128xf32>, vector<8x128xf32> -> vector<8x128xf32>
    %329 = arith.addf %327, %328 : vector<8x128xf32>
    %330 = vector.extract_strided_slice %329 {offsets = [0, 0], sizes = [8, 96], strides = [1, 1]} : vector<8x128xf32> to vector<8x96xf32>
    %331 = arith.negf %330 : vector<8x96xf32>
    %332 = math.exp %331 : vector<8x96xf32>
    %cst_88 = arith.constant 1.000000e+00 : f32
    %333 = vector.broadcast %cst_88 : f32 to vector<8x96xf32>
    %334 = arith.addf %333, %332 : vector<8x96xf32>
    %335 = arith.divf %333, %334 : vector<8x96xf32>
    %336 = vector.extract_strided_slice %329 {offsets = [0, 96], sizes = [8, 32], strides = [1, 1]} : vector<8x128xf32> to vector<8x32xf32>
    %337 = math.tanh %336 : vector<8x32xf32>
    %338 = vector.extract_strided_slice %335 {offsets = [0, 0], sizes = [8, 32], strides = [1, 1]} : vector<8x96xf32> to vector<8x32xf32>
    %339 = vector.extract_strided_slice %335 {offsets = [0, 32], sizes = [8, 32], strides = [1, 1]} : vector<8x96xf32> to vector<8x32xf32>
    %340 = vector.extract_strided_slice %335 {offsets = [0, 64], sizes = [8, 32], strides = [1, 1]} : vector<8x96xf32> to vector<8x32xf32>
    %341 = arith.mulf %339, %302 : vector<8x32xf32>
    %342 = arith.mulf %338, %337 : vector<8x32xf32>
    %343 = arith.addf %341, %342 : vector<8x32xf32>
    %344 = math.tanh %343 : vector<8x32xf32>
    %345 = arith.mulf %340, %344 : vector<8x32xf32>
    %c56_89 = arith.constant 56 : index
    %c0_90 = arith.constant 0 : index
    %346 = vector.load %arg17[%c56_89, %c0_90] : memref<64x32xf32, #tpu.memory_space<vmem>>, vector<8x32xf32>
    tpu.vector_store %arg17[%c56_89, %c0_90], %345 {strides = array<i32>} : memref<64x32xf32, #tpu.memory_space<vmem>>, vector<8x32xf32>,
    %c0_91 = arith.constant 0 : index
    %c0_92 = arith.constant 0 : index
    %c0_93 = arith.constant 0 : index
    %347 = vector.load %arg14[%c0_91, %c0_92, %c0_93] : memref<2x8x32xf32, #tpu.memory_space<vmem>>, vector<1x8x32xf32>
    %348 = vector.shape_cast %347 : vector<1x8x32xf32> to vector<8x32xf32>
    %349 = vector.shape_cast %324 : vector<8x32xf32> to vector<1x8x32xf32>
    tpu.vector_store %arg14[%c0_91, %c0_92, %c0_93], %349 {strides = array<i32>} : memref<2x8x32xf32, #tpu.memory_space<vmem>>, vector<1x8x32xf32>,
    %c0_94 = arith.constant 0 : index
    %c0_95 = arith.constant 0 : index
    %c0_96 = arith.constant 0 : index
    %350 = vector.load %arg15[%c0_94, %c0_95, %c0_96] : memref<2x8x32xf32, #tpu.memory_space<vmem>>, vector<1x8x32xf32>
    %351 = vector.shape_cast %350 : vector<1x8x32xf32> to vector<8x32xf32>
    %352 = vector.shape_cast %322 : vector<8x32xf32> to vector<1x8x32xf32>
    tpu.vector_store %arg15[%c0_94, %c0_95, %c0_96], %352 {strides = array<i32>} : memref<2x8x32xf32, #tpu.memory_space<vmem>>, vector<1x8x32xf32>,
    %c1_97 = arith.constant 1 : index
    %c0_98 = arith.constant 0 : index
    %c0_99 = arith.constant 0 : index
    %353 = vector.load %arg14[%c1_97, %c0_98, %c0_99] : memref<2x8x32xf32, #tpu.memory_space<vmem>>, vector<1x8x32xf32>
    %354 = vector.shape_cast %353 : vector<1x8x32xf32> to vector<8x32xf32>
    %355 = vector.shape_cast %345 : vector<8x32xf32> to vector<1x8x32xf32>
    tpu.vector_store %arg14[%c1_97, %c0_98, %c0_99], %355 {strides = array<i32>} : memref<2x8x32xf32, #tpu.memory_space<vmem>>, vector<1x8x32xf32>,
    %c1_100 = arith.constant 1 : index
    %c0_101 = arith.constant 0 : index
    %c0_102 = arith.constant 0 : index
    %356 = vector.load %arg15[%c1_100, %c0_101, %c0_102] : memref<2x8x32xf32, #tpu.memory_space<vmem>>, vector<1x8x32xf32>
    %357 = vector.shape_cast %356 : vector<1x8x32xf32> to vector<8x32xf32>
    %358 = vector.shape_cast %343 : vector<8x32xf32> to vector<1x8x32xf32>
    tpu.vector_store %arg15[%c1_100, %c0_101, %c0_102], %358 {strides = array<i32>} : memref<2x8x32xf32, #tpu.memory_space<vmem>>, vector<1x8x32xf32>,
    %c0_103 = arith.constant 0 : index
    %c0_104 = arith.constant 0 : index
    %359 = vector.load %arg17[%c0_103, %c0_104] : memref<64x32xf32, #tpu.memory_space<vmem>>, vector<64x32xf32>
    %c0_105 = arith.constant 0 : index
    %c0_106 = arith.constant 0 : index
    %360 = vector.load %arg9[%c0_105, %c0_106] : memref<32x32xf32, #tpu.memory_space<vmem>>, vector<32x32xf32>
    %cst_107 = arith.constant dense<0.000000e+00> : vector<64x32xf32>
    %361 = tpu.matmul %359, %360, %cst_107 {dimension_numbers = #tpu.dot_dimension_numbers<[1], [0], [0], [1], [0, 0, 1, 1], [], []>} : vector<64x32xf32>, vector<32x32xf32>, vector<64x32xf32> -> vector<64x32xf32>
    %c0_108 = arith.constant 0 : index
    %c0_109 = arith.constant 0 : index
    %362 = vector.load %arg10[%c0_108, %c0_109] : memref<1x32xf32, #tpu.memory_space<vmem>>, vector<1x32xf32>
    %363 = vector.broadcast %362 : vector<1x32xf32> to vector<64x32xf32>
    %364 = arith.addf %361, %363 : vector<64x32xf32>
    %cst_110 = arith.constant 0.000000e+00 : f32
    %365 = vector.broadcast %cst_110 : f32 to vector<64x32xf32>
    %366 = arith.cmpf ogt, %364, %365 : vector<64x32xf32>
    %cst_111 = arith.constant 0.000000e+00 : f32
    %367 = vector.broadcast %cst_111 : f32 to vector<64x32xf32>
    %368 = arith.minimumf %364, %367 : vector<64x32xf32>
    %369 = math.exp %368 : vector<64x32xf32>
    %cst_112 = arith.constant 1.000000e+00 : f32
    %370 = vector.broadcast %cst_112 : f32 to vector<64x32xf32>
    %371 = arith.subf %369, %370 : vector<64x32xf32>
    %372 = arith.select %366, %364, %371 : vector<64x32xi1>, vector<64x32xf32>
    %c0_113 = arith.constant 0 : index
    %c0_114 = arith.constant 0 : index
    %373 = vector.load %arg11[%c0_113, %c0_114] : memref<1x32xf32, #tpu.memory_space<vmem>>, vector<1x32xf32>
    %374 = vector.broadcast %373 : vector<1x32xf32> to vector<64x32xf32>
    %375 = arith.mulf %372, %374 : vector<64x32xf32>
    %cst_115 = arith.constant dense<0.000000e+00> : vector<64xf32>
    %376 = vector.multi_reduction <add>, %375, %cst_115 [1] : vector<64x32xf32> to vector<64xf32>
    %377 = vector.shape_cast %376 : vector<64xf32> to vector<64x1xf32>
    %c0_116 = arith.constant 0 : index
    %c0_117 = arith.constant 0 : index
    %378 = vector.load %arg12[%c0_116, %c0_117] : memref<1x1xf32, #tpu.memory_space<vmem>>, vector<1x1xf32>
    %379 = vector.broadcast %378 : vector<1x1xf32> to vector<64x1xf32>
    %380 = arith.addf %377, %379 : vector<64x1xf32>
    %c0_118 = arith.constant 0 : index
    %c0_119 = arith.constant 0 : index
    %381 = vector.load %arg13[%c0_118, %c0_119] : memref<64x1xf32, #tpu.memory_space<vmem>>, vector<64x1xf32>
    tpu.vector_store %arg13[%c0_118, %c0_119], %380 {strides = array<i32>} : memref<64x1xf32, #tpu.memory_space<vmem>>, vector<64x1xf32>,
    return
  }
}

</mosaic_0001>

<llo_original>
// kernel: tpu_custom_call.1
$region0: #{tpu_custom_call.1}
  #allocation0 [shape = 'u32[]', space=smem, size = 0x4, offset = 0x4, fixed_abs, tag = 'smem constant byte address 0x4 - core index']
  #allocation1 [shape = 'u32[72,128]{1,0:T(1,128)}', space=vmem, size = 0x9000, scoped, tag = 'internal scratch']
  #allocation2 [shape = 'f32[64,128]{1,0:T(8,128)}', space=vmem, size = 0x8000, scoped, tag = 'scratch operand']
  #allocation3 [shape = 'f32[64,32]{1,0:T(8,128)}', space=vmem, size = 0x8000, scoped, tag = 'scratch operand']
  #allocation4 [shape = 'f32[1,1]{1,0:T(1,128)S(1)}', space=vmem, size = 0x200, scoped, tag = 'scoped memory for tpu_custom_call.1']
  %s0 = inlined_call_operand.vmem [shape: f32[64,16], index: 0, kind: input, shape index: {}]
  %s1 = inlined_call_operand.vmem [shape: f32[2,8,32], index: 1, kind: input, shape index: {}]
  %s2 = inlined_call_operand.hbm [shape: f32[2,8,32], index: 2, kind: input, shape index: {}]
  %s3 = inlined_call_operand.hbm [shape: f32[16,128], index: 3, kind: input, shape index: {}]
  %s4 = inlined_call_operand.vmem [shape: f32[32,128], index: 4, kind: input, shape index: {}]
  %s5 = inlined_call_operand.vmem [shape: f32[1,128], index: 5, kind: input, shape index: {}]
  %s6 = inlined_call_operand.vmem [shape: f32[32,128], index: 6, kind: input, shape index: {}]
  %s7 = inlined_call_operand.hbm [shape: f32[32,128], index: 7, kind: input, shape index: {}]
  %s8 = inlined_call_operand.vmem [shape: f32[1,128], index: 8, kind: input, shape index: {}]
  %s9 = inlined_call_operand.hbm [shape: f32[32,32], index: 9, kind: input, shape index: {}]
  %s10 = inlined_call_operand.vmem [shape: f32[1,32], index: 10, kind: input, shape index: {}]
  %s11 = inlined_call_operand.vmem [shape: f32[1,32], index: 11, kind: input, shape index: {}]
  %s12 = inlined_call_operand.<no memory space> [shape: f32[1,1], index: 12, kind: input, shape index: {}]
  %s13 = inlined_call_operand.vmem [shape: f32[64,1], index: 13, kind: output, shape index: {0}]
  %s14 = inlined_call_operand.hbm [shape: f32[2,8,32], index: 14, kind: output, shape index: {1}]
  %s15 = inlined_call_operand.hbm [shape: f32[2,8,32], index: 15, kind: output, shape index: {2}]
  %16 = xla_tuple %s13, %s14, %s15
  %s17 = sld [smem:[#allocation0]]
  $region94: #{tpu_custom_call.1} parent=0
    _
  %s19 = ssub.s32 1, %s17
  %s20 = scalar_select 0, %s19, %s17
  %v21 = vstv %s12
  %22 = vst [vmem:[#allocation4] sm:$0x1] %v21
  $region1: #{tpu_custom_call.1} parent=0
    #allocation5 [shape = 'u8[8192]{0}', space=vmem, size = 0x2000, scoped, tag = 'input window, operand 2, single buffered']
    #allocation6 [shape = 's32[1]{0}', space=sflag, size = 0x4, scoped, tag = 'scoped memory for tpu_custom_call.1']
    #allocation7 [shape = 's32[1]{0}', space=sflag, size = 0x4, scoped, tag = 'scoped memory for tpu_custom_call.1']
    #allocation8 [shape = 'u8[8192]{0}', space=vmem, size = 0x2000, scoped, tag = 'input window, operand 3, single buffered']
    #allocation9 [shape = 's32[1]{0}', space=sflag, size = 0x4, scoped, tag = 'scoped memory for tpu_custom_call.1']
    #allocation10 [shape = 'u8[16384]{0}', space=vmem, size = 0x4000, scoped, tag = 'input window, operand 7, single buffered']
    #allocation11 [shape = 'u8[16384]{0}', space=vmem, size = 0x4000, scoped, tag = 'input window, operand 9, single buffered']
    #allocation12 [shape = 's32[1]{0}', space=sflag, size = 0x4, scoped, tag = 'scoped memory for tpu_custom_call.1']
    #allocation13 [shape = 'u8[8192]{0}', space=vmem, size = 0x2000, scoped, tag = 'output window, operand 1, single buffered']
    #allocation14 [shape = 'u8[8192]{0}', space=vmem, size = 0x2000, scoped, tag = 'output window, operand 2, single buffered']
    #allocation15 [shape = 's32[1]{0}', space=sflag, size = 0x4, scoped, tag = 'scoped memory for tpu_custom_call.1']
    %23 = vsyncpa [#allocation6], 0
    %24 = vsyncpa [#allocation9], 0
    %25 = vsyncpa [#allocation12], 0
    %26 = vsyncpa [#allocation7], 0
    %27 = vsyncpa [#allocation15], 0
    // Predicated region
    $region2: #{tpu_custom_call.1} parent=1 // pred_check
      _
    $region3: #{tpu_custom_call.1} parent=1 // pred_check_branch
      %29 = sbr.rel (0) target = $region5
    $region4: #{tpu_custom_call.1} parent=1 // pred_region
      _
    $region5: #{tpu_custom_call.1} parent=1 // pred_fallthru
      _
    // Predicated region
    $region6: #{tpu_custom_call.1} parent=1 // pred_check
      _
    $region7: #{tpu_custom_call.1} parent=1 // pred_check_branch
      %31 = sbr.rel (0) target = $region9
    $region8: #{tpu_custom_call.1} parent=1 // pred_region
      _
    $region9: #{tpu_custom_call.1} parent=1 // pred_fallthru
      _
    // Predicated region
    $region10: #{tpu_custom_call.1} parent=1 // pred_check
      _
    $region11: #{tpu_custom_call.1} parent=1 // pred_check_branch
      %33 = sbr.rel (0) target = $region13
    $region12: #{tpu_custom_call.1} parent=1 // pred_region
      %35 = vsyncadd [#allocation6], 0
      %s36 = sshll.u32 %s2, 4
      %s37 = int_to_ptr.hbm [resolvable:$true] %s36
      %s38 = sshll.u32 [#allocation5], 4
      %s39 = int_to_ptr.vmem [resolvable:$true] %s38
      %44 = dma.hbm_to_vmem [thread:$0]  %s37, 256, %s39, [#allocation6], 128, 128, 8
    $region13: #{tpu_custom_call.1} parent=1 // pred_fallthru
      _
    // Predicated region
    $region14: #{tpu_custom_call.1} parent=1 // pred_check
      _
    $region15: #{tpu_custom_call.1} parent=1 // pred_check_branch
      %46 = sbr.rel (0) target = $region17
    $region16: #{tpu_custom_call.1} parent=1 // pred_region
      %48 = vsyncadd [#allocation9], 0
      %s49 = sshll.u32 %s3, 4
      %s50 = int_to_ptr.hbm [resolvable:$true] %s49
      %s51 = sshll.u32 [#allocation8], 4
      %s52 = int_to_ptr.vmem [resolvable:$true] %s51
      %57 = dma.hbm_to_vmem [thread:$0]  %s50, 256, %s52, [#allocation9], 128, 128, 8
    $region17: #{tpu_custom_call.1} parent=1 // pred_fallthru
      _
    // Predicated region
    $region18: #{tpu_custom_call.1} parent=1 // pred_check
      _
    $region19: #{tpu_custom_call.1} parent=1 // pred_check_branch
      %59 = sbr.rel (0) target = $region21
    $region20: #{tpu_custom_call.1} parent=1 // pred_region
      _
    $region21: #{tpu_custom_call.1} parent=1 // pred_fallthru
      _
    // Predicated region
    $region22: #{tpu_custom_call.1} parent=1 // pred_check
      _
    $region23: #{tpu_custom_call.1} parent=1 // pred_check_branch
      %61 = sbr.rel (0) target = $region25
    $region24: #{tpu_custom_call.1} parent=1 // pred_region
      _
    $region25: #{tpu_custom_call.1} parent=1 // pred_fallthru
      _
    // Predicated region
    $region26: #{tpu_custom_call.1} parent=1 // pred_check
      _
    $region27: #{tpu_custom_call.1} parent=1 // pred_check_branch
      %63 = sbr.rel (0) target = $region29
    $region28: #{tpu_custom_call.1} parent=1 // pred_region
      _
    $region29: #{tpu_custom_call.1} parent=1 // pred_fallthru
      _
    // Predicated region
    $region30: #{tpu_custom_call.1} parent=1 // pred_check
      _
    $region31: #{tpu_custom_call.1} parent=1 // pred_check_branch
      %65 = sbr.rel (0) target = $region33
    $region32: #{tpu_custom_call.1} parent=1 // pred_region
      %67 = vsyncadd [#allocation9], 0
      %s68 = sshll.u32 %s7, 4
      %s69 = int_to_ptr.hbm [resolvable:$true] %s68
      %s70 = sshll.u32 [#allocation10], 4
      %s71 = int_to_ptr.vmem [resolvable:$true] %s70
      %76 = dma.hbm_to_vmem [thread:$0]  %s69, 512, %s71, [#allocation9], 128, 128, 8
    $region33: #{tpu_custom_call.1} parent=1 // pred_fallthru
      _
    // Predicated region
    $region34: #{tpu_custom_call.1} parent=1 // pred_check
      _
    $region35: #{tpu_custom_call.1} parent=1 // pred_check_branch
      %78 = sbr.rel (0) target = $region37
    $region36: #{tpu_custom_call.1} parent=1 // pred_region
      _
    $region37: #{tpu_custom_call.1} parent=1 // pred_fallthru
      _
    // Predicated region
    $region38: #{tpu_custom_call.1} parent=1 // pred_check
      _
    $region39: #{tpu_custom_call.1} parent=1 // pred_check_branch
      %80 = sbr.rel (0) target = $region41
    $region40: #{tpu_custom_call.1} parent=1 // pred_region
      %82 = vsyncadd [#allocation12], 0
      %s83 = sshll.u32 %s9, 4
      %s84 = int_to_ptr.hbm [resolvable:$true] %s83
      %s85 = sshll.u32 [#allocation11], 4
      %s86 = int_to_ptr.vmem [resolvable:$true] %s85
      %91 = dma.hbm_to_vmem [thread:$0]  %s84, 512, %s86, [#allocation12], 128, 128, 8
    $region41: #{tpu_custom_call.1} parent=1 // pred_fallthru
      _
    // Predicated region
    $region42: #{tpu_custom_call.1} parent=1 // pred_check
      _
    $region43: #{tpu_custom_call.1} parent=1 // pred_check_branch
      %93 = sbr.rel (0) target = $region45
    $region44: #{tpu_custom_call.1} parent=1 // pred_region
      _
    $region45: #{tpu_custom_call.1} parent=1 // pred_fallthru
      _
    // Predicated region
    $region46: #{tpu_custom_call.1} parent=1 // pred_check
      _
    $region47: #{tpu_custom_call.1} parent=1 // pred_check_branch
      %95 = sbr.rel (0) target = $region49
    $region48: #{tpu_custom_call.1} parent=1 // pred_region
      _
    $region49: #{tpu_custom_call.1} parent=1 // pred_fallthru
      _
    // Predicated region
    $region50: #{tpu_custom_call.1} parent=1 // pred_check
      _
    $region51: #{tpu_custom_call.1} parent=1 // pred_check_branch
      %97 = sbr.rel (0) target = $region53
    $region52: #{tpu_custom_call.1} parent=1 // pred_region
      _
    $region53: #{tpu_custom_call.1} parent=1 // pred_fallthru
      _
    // Predicated region
    $region54: #{tpu_custom_call.1} parent=1 // pred_check
      _
    $region55: #{tpu_custom_call.1} parent=1 // pred_check_branch
      %99 = sbr.rel (0) target = $region57
    $region56: #{tpu_custom_call.1} parent=1 // pred_region
      %101 = dma.done [#allocation6], 256
    $region57: #{tpu_custom_call.1} parent=1 // pred_fallthru
      _
    // Predicated region
    $region58: #{tpu_custom_call.1} parent=1 // pred_check
      _
    $region59: #{tpu_custom_call.1} parent=1 // pred_check_branch
      %103 = sbr.rel (0) target = $region61
    $region60: #{tpu_custom_call.1} parent=1 // pred_region
      %105 = dma.done [#allocation9], 256
    $region61: #{tpu_custom_call.1} parent=1 // pred_fallthru
      _
    // Predicated region
    $region62: #{tpu_custom_call.1} parent=1 // pred_check
      _
    $region63: #{tpu_custom_call.1} parent=1 // pred_check_branch
      %107 = sbr.rel (0) target = $region65
    $region64: #{tpu_custom_call.1} parent=1 // pred_region
      %109 = dma.done [#allocation9], 512
    $region65: #{tpu_custom_call.1} parent=1 // pred_fallthru
      _
    // Predicated region
    $region66: #{tpu_custom_call.1} parent=1 // pred_check
      _
    $region67: #{tpu_custom_call.1} parent=1 // pred_check_branch
      %111 = sbr.rel (0) target = $region69
    $region68: #{tpu_custom_call.1} parent=1 // pred_region
      %113 = dma.done [#allocation12], 512
    $region69: #{tpu_custom_call.1} parent=1 // pred_fallthru
      _
    %v114 = vld [vmem:[#allocation8] sm:$0xff]
    %v115 = vld [vmem:[#allocation8 + $0x8] sm:$0xff]
    %v116 = vld [vmem:[%s6] sm:$0xff]
    %v117 = vld [vmem:[%s6 + $0x8] sm:$0xff]
    %v118 = vld [vmem:[%s6 + $0x10] sm:$0xff]
    %v119 = vld [vmem:[%s6 + $0x18] sm:$0xff]
    %v120 = vld [vmem:[%s4] sm:$0xff]
    %v121 = vld [vmem:[%s4 + $0x8] sm:$0xff]
    %v122 = vld [vmem:[%s4 + $0x10] sm:$0xff]
    %v123 = vld [vmem:[%s4 + $0x18] sm:$0xff]
    %v124 = vld [vmem:[#allocation10] sm:$0xff]
    %v125 = vld [vmem:[#allocation10 + $0x8] sm:$0xff]
    %v126 = vld [vmem:[#allocation10 + $0x10] sm:$0xff]
    %v127 = vld [vmem:[#allocation10 + $0x18] sm:$0xff]
    %v128 = vld [vmem:[%s5] sm:$0x1]
    %v129 = vld [vmem:[%s8] sm:$0x1]
    %v130 = vld [vmem:[%s0] sm:$0xff]
    %v131 = vld [vmem:[%s0 + $0x8] sm:$0xff]
    %v132 = vld [vmem:[%s0 + $0x10] sm:$0xff]
    %v133 = vld [vmem:[%s0 + $0x18] sm:$0xff]
    %v134 = vld [vmem:[%s0 + $0x20] sm:$0xff]
    %v135 = vld [vmem:[%s0 + $0x28] sm:$0xff]
    %v136 = vld [vmem:[%s0 + $0x30] sm:$0xff]
    %v137 = vld [vmem:[%s0 + $0x38] sm:$0xff]
    %v139 = vperm.slane %v128, 0
    %vm141 = vcmask 130048
    %v143 = vsel %vm141, %v130, 0
    %v146 = vsel %vm141, %v131, 0
    %v149 = vsel %vm141, %v132, 0
    %v152 = vsel %vm141, %v133, 0
    %v155 = vsel %vm141, %v134, 0
    %v158 = vsel %vm141, %v135, 0
    %v161 = vsel %vm141, %v136, 0
    %v164 = vsel %vm141, %v137, 0
    %166 = vmatpush.msra.mxu0 0.0
    %167 = vmatpush.msra.mxu0 0.0
    %168 = vmatpush.msra.mxu0 0.0
    %169 = vmatpush.msra.mxu0 0.0
    %170 = vmatpush.msra.mxu0 0.0
    %171 = vmatpush.msra.mxu0 0.0
    %172 = vmatpush.msra.mxu0 0.0
    %173 = vmatpush.msra.mxu0 0.0
    %174 = vmatpush.msra.mxu0 0.0
    %175 = vmatpush.msra.mxu0 0.0
    %176 = vmatpush.msra.mxu0 0.0
    %177 = vmatpush.msra.mxu0 0.0
    %178 = vmatpush.msra.mxu0 0.0
    %179 = vmatpush.msra.mxu0 0.0
    %180 = vmatpush.msra.mxu0 %v115
    %181 = vmatpush.msra.mxu0 %v114
    %182 = vmatmul.f32.gmra.mxu0 %v143
    %v183 = vpop.f32.mrf.mxu0
    %v184 = vadd.f32 %v139, %v183
    %185 = vmatmul.f32.gmra.mxu0 %v146
    %v186 = vpop.f32.mrf.mxu0
    %v187 = vadd.f32 %v139, %v186
    %188 = vmatmul.f32.gmra.mxu0 %v149
    %v189 = vpop.f32.mrf.mxu0
    %v190 = vadd.f32 %v139, %v189
    %191 = vmatmul.f32.gmra.mxu0 %v152
    %v192 = vpop.f32.mrf.mxu0
    %v193 = vadd.f32 %v139, %v192
    %194 = vmatmul.f32.gmra.mxu0 %v155
    %v195 = vpop.f32.mrf.mxu0
    %v196 = vadd.f32 %v139, %v195
    %197 = vmatmul.f32.gmra.mxu0 %v158
    %v198 = vpop.f32.mrf.mxu0
    %v199 = vadd.f32 %v139, %v198
    %200 = vmatmul.f32.gmra.mxu0 %v161
    %v201 = vpop.f32.mrf.mxu0
    %v202 = vadd.f32 %v139, %v201
    %203 = vmatmul.f32.gmra.mxu0 %v164
    %v204 = vpop.f32.mrf.mxu0
    %v205 = vadd.f32 %v139, %v204
    %206 = vdwg.mxu0
    %207 = vst [vmem:[#allocation2] sm:$0xff] %v184
    %208 = vst [vmem:[#allocation2 + $0x8] sm:$0xff] %v187
    %209 = vst [vmem:[#allocation2 + $0x10] sm:$0xff] %v190
    %210 = vst [vmem:[#allocation2 + $0x18] sm:$0xff] %v193
    %211 = vst [vmem:[#allocation2 + $0x20] sm:$0xff] %v196
    %212 = vst [vmem:[#allocation2 + $0x28] sm:$0xff] %v199
    %213 = vst [vmem:[#allocation2 + $0x30] sm:$0xff] %v202
    %214 = vst [vmem:[#allocation2 + $0x38] sm:$0xff] %v205
    %v215 = vld [vmem:[%s1] sm:$0xff]
    %s216 = scalar_lea.vmem %s1, 8
    %v217 = vld [vmem:[%s216] sm:$0xff]
    %v218 = vld [vmem:[#allocation5] sm:$0xff]
    %s219 = scalar_lea.vmem [#allocation5], 8
    %v220 = vld [vmem:[%s219] sm:$0xff]
    %v221 = vld [vmem:[#allocation2] sm:$0xff]
    %vm222 = vcmask 261120
    %v224 = vsel %vm222, %v215, 0
    %226 = vmatpush.msra.mxu0 0.0
    %227 = vmatpush.msra.mxu0 0.0
    %228 = vmatpush.msra.mxu0 0.0
    %229 = vmatpush.msra.mxu0 0.0
    %230 = vmatpush.msra.mxu0 0.0
    %231 = vmatpush.msra.mxu0 0.0
    %232 = vmatpush.msra.mxu0 0.0
    %233 = vmatpush.msra.mxu0 0.0
    %234 = vmatpush.msra.mxu0 0.0
    %235 = vmatpush.msra.mxu0 0.0
    %236 = vmatpush.msra.mxu0 0.0
    %237 = vmatpush.msra.mxu0 0.0
    %238 = vmatpush.msra.mxu0 %v123
    %239 = vmatpush.msra.mxu0 %v122
    %240 = vmatpush.msra.mxu0 %v121
    %241 = vmatpush.msra.mxu0 %v120
    %242 = vmatmul.f32.gmra.mxu0 %v224
    %v243 = vpop.f32.mrf.mxu0
    %v244 = vadd.f32 0.0, %v243
    %245 = vdwg.mxu0
    %v246 = vadd.f32 %v221, %v244
    %v247 = vxor.u32 %v246, 2147483648
    %v248 = vmul.f32 %v247, 1.442695
    %v249 = vpow.pop %v248
    %v250 = vadd.f32 %v249, 1.0
    %v251 = vrcp.pop %v250
    %v252 = vmul.f32 %v250, %v251
    %v253 = vsub.f32 1.0, %v252
    %v254 = vmul.f32 %v251, %v253
    %v255 = vadd.f32 %v251, %v254
    %vm256 = vweird.f32 %v250
    %vm257 = vweird.f32 %v251
    %vm258 = vmor %vm256, %vm257
    %v259 = vsel %vm258, %v251, %v255
    %v260 = vand.u32 2147483647, %v250
    %vm261 = vcmp.eq.f32.partialorder %v260, 8.507059e+37
    %v262 = vand.u32 %v250, 2147483648
    %v263 = vor.u32 1.1754944e-38, %v262
    %v264 = vsel %vm261, %v263, %v259
    %v265 = vmul.f32 1.0, %v264
    %v266 = vtanh.pop %v246
    %268 = vrot.lane.b32.xlu0 %v218, 32
    %v269 = vpop.permute.xlu0 %268
    %v271 = vmul.f32 %v265, %v269
    %273 = vrot.lane.b32.xlu0 %v266, 32
    %v274 = vpop.permute.xlu0 %273
    %v276 = vmul.f32 %v265, %v274
    %278 = vrot.lane.b32.xlu0 %v276, 32
    %v279 = vpop.permute.xlu0 %278
    %v281 = vadd.f32 %v271, %v279
    %v282 = vtanh.pop %v281
    %284 = vrot.lane.b32.xlu0 %v282, 32
    %v285 = vpop.permute.xlu0 %284
    %v287 = vmul.f32 %v265, %v285
    %v289 = vperm.slane %v129, 0
    %292 = vrot.lane.b32.xlu0 %v287, 64
    %v293 = vpop.permute.xlu0 %292
    %v294 = vsel %vm222, %v293, 0
    %296 = vmatpush.msra.mxu0 0.0
    %297 = vmatpush.msra.mxu0 0.0
    %298 = vmatpush.msra.mxu0 0.0
    %299 = vmatpush.msra.mxu0 0.0
    %300 = vmatpush.msra.mxu0 0.0
    %301 = vmatpush.msra.mxu0 0.0
    %302 = vmatpush.msra.mxu0 0.0
    %303 = vmatpush.msra.mxu0 0.0
    %304 = vmatpush.msra.mxu0 0.0
    %305 = vmatpush.msra.mxu0 0.0
    %306 = vmatpush.msra.mxu0 0.0
    %307 = vmatpush.msra.mxu0 0.0
    %308 = vmatpush.msra.mxu0 %v119
    %309 = vmatpush.msra.mxu0 %v118
    %310 = vmatpush.msra.mxu0 %v117
    %311 = vmatpush.msra.mxu0 %v116
    %312 = vmatmul.f32.gmra.mxu0 %v294
    %v313 = vpop.f32.mrf.mxu0
    %v314 = vadd.f32 %v289, %v313
    %315 = vdwg.mxu0
    %v317 = vsel %vm222, %v217, 0
    %319 = vmatpush.msra.mxu0 0.0
    %320 = vmatpush.msra.mxu0 0.0
    %321 = vmatpush.msra.mxu0 0.0
    %322 = vmatpush.msra.mxu0 0.0
    %323 = vmatpush.msra.mxu0 0.0
    %324 = vmatpush.msra.mxu0 0.0
    %325 = vmatpush.msra.mxu0 0.0
    %326 = vmatpush.msra.mxu0 0.0
    %327 = vmatpush.msra.mxu0 0.0
    %328 = vmatpush.msra.mxu0 0.0
    %329 = vmatpush.msra.mxu0 0.0
    %330 = vmatpush.msra.mxu0 0.0
    %331 = vmatpush.msra.mxu0 %v127
    %332 = vmatpush.msra.mxu0 %v126
    %333 = vmatpush.msra.mxu0 %v125
    %334 = vmatpush.msra.mxu0 %v124
    %335 = vmatmul.f32.gmra.mxu0 %v317
    %v336 = vpop.f32.mrf.mxu0
    %v337 = vadd.f32 0.0, %v336
    %338 = vdwg.mxu0
    %v339 = vadd.f32 %v314, %v337
    %v340 = vxor.u32 %v339, 2147483648
    %v341 = vmul.f32 %v340, 1.442695
    %v342 = vpow.pop %v341
    %v343 = vadd.f32 %v342, 1.0
    %v344 = vrcp.pop %v343
    %v345 = vmul.f32 %v343, %v344
    %v346 = vsub.f32 1.0, %v345
    %v347 = vmul.f32 %v344, %v346
    %v348 = vadd.f32 %v344, %v347
    %vm349 = vweird.f32 %v343
    %vm350 = vweird.f32 %v344
    %vm351 = vmor %vm349, %vm350
    %v352 = vsel %vm351, %v344, %v348
    %v353 = vand.u32 2147483647, %v343
    %vm354 = vcmp.eq.f32.partialorder %v353, 8.507059e+37
    %v355 = vand.u32 %v343, 2147483648
    %v356 = vor.u32 1.1754944e-38, %v355
    %v357 = vsel %vm354, %v356, %v352
    %v358 = vmul.f32 1.0, %v357
    %v359 = vtanh.pop %v339
    %361 = vrot.lane.b32.xlu0 %v220, 32
    %v362 = vpop.permute.xlu0 %361
    %v364 = vmul.f32 %v358, %v362
    %366 = vrot.lane.b32.xlu0 %v359, 32
    %v367 = vpop.permute.xlu0 %366
    %v369 = vmul.f32 %v358, %v367
    %371 = vrot.lane.b32.xlu0 %v369, 32
    %v372 = vpop.permute.xlu0 %371
    %v374 = vadd.f32 %v364, %v372
    %v375 = vtanh.pop %v374
    %377 = vrot.lane.b32.xlu0 %v375, 32
    %v378 = vpop.permute.xlu0 %377
    %v380 = vmul.f32 %v358, %v378
    %382 = vrot.lane.b32.xlu0 %v380, 64
    %v383 = vpop.permute.xlu0 %382
    %385 = vst.msk [vmem:[#allocation3] sm:$0xff] %vm222, %v383
    %v386 = vld [vmem:[#allocation2 + $0x8] sm:$0xff]
    %387 = vmatpush.msra.mxu0 0.0
    %388 = vmatpush.msra.mxu0 0.0
    %389 = vmatpush.msra.mxu0 0.0
    %390 = vmatpush.msra.mxu0 0.0
    %391 = vmatpush.msra.mxu0 0.0
    %392 = vmatpush.msra.mxu0 0.0
    %393 = vmatpush.msra.mxu0 0.0
    %394 = vmatpush.msra.mxu0 0.0
    %395 = vmatpush.msra.mxu0 0.0
    %396 = vmatpush.msra.mxu0 0.0
    %397 = vmatpush.msra.mxu0 0.0
    %398 = vmatpush.msra.mxu0 0.0
    %399 = vmatpush.msra.mxu0 %v123
    %400 = vmatpush.msra.mxu0 %v122
    %401 = vmatpush.msra.mxu0 %v121
    %402 = vmatpush.msra.mxu0 %v120
    %403 = vmatmul.f32.gmra.mxu0 %v294
    %v404 = vpop.f32.mrf.mxu0
    %v405 = vadd.f32 0.0, %v404
    %406 = vdwg.mxu0
    %v407 = vadd.f32 %v386, %v405
    %v408 = vxor.u32 %v407, 2147483648
    %v409 = vmul.f32 %v408, 1.442695
    %v410 = vpow.pop %v409
    %v411 = vadd.f32 %v410, 1.0
    %v412 = vrcp.pop %v411
    %v413 = vmul.f32 %v411, %v412
    %v414 = vsub.f32 1.0, %v413
    %v415 = vmul.f32 %v412, %v414
    %v416 = vadd.f32 %v412, %v415
    %vm417 = vweird.f32 %v411
    %vm418 = vweird.f32 %v412
    %vm419 = vmor %vm417, %vm418
    %v420 = vsel %vm419, %v412, %v416
    %v421 = vand.u32 2147483647, %v411
    %vm422 = vcmp.eq.f32.partialorder %v421, 8.507059e+37
    %v423 = vand.u32 %v411, 2147483648
    %v424 = vor.u32 1.1754944e-38, %v423
    %v425 = vsel %vm422, %v424, %v420
    %v426 = vmul.f32 1.0, %v425
    %v427 = vtanh.pop %v407
    %v428 = vmul.f32 %v426, %v281
    %430 = vrot.lane.b32.xlu0 %v427, 32
    %v431 = vpop.permute.xlu0 %430
    %v433 = vmul.f32 %v426, %v431
    %435 = vrot.lane.b32.xlu0 %v433, 32
    %v436 = vpop.permute.xlu0 %435
    %v438 = vadd.f32 %v428, %v436
    %v439 = vtanh.pop %v438
    %441 = vrot.lane.b32.xlu0 %v439, 32
    %v442 = vpop.permute.xlu0 %441
    %v444 = vmul.f32 %v426, %v442
    %446 = vrot.lane.b32.xlu0 %v444, 64
    %v447 = vpop.permute.xlu0 %446
    %v448 = vsel %vm222, %v447, 0
    %450 = vmatpush.msra.mxu0 0.0
    %451 = vmatpush.msra.mxu0 0.0
    %452 = vmatpush.msra.mxu0 0.0
    %453 = vmatpush.msra.mxu0 0.0
    %454 = vmatpush.msra.mxu0 0.0
    %455 = vmatpush.msra.mxu0 0.0
    %456 = vmatpush.msra.mxu0 0.0
    %457 = vmatpush.msra.mxu0 0.0
    %458 = vmatpush.msra.mxu0 0.0
    %459 = vmatpush.msra.mxu0 0.0
    %460 = vmatpush.msra.mxu0 0.0
    %461 = vmatpush.msra.mxu0 0.0
    %462 = vmatpush.msra.mxu0 %v119
    %463 = vmatpush.msra.mxu0 %v118
    %464 = vmatpush.msra.mxu0 %v117
    %465 = vmatpush.msra.mxu0 %v116
    %466 = vmatmul.f32.gmra.mxu0 %v448
    %v467 = vpop.f32.mrf.mxu0
    %v468 = vadd.f32 %v289, %v467
    %469 = vdwg.mxu0
    %v470 = vsel %vm222, %v383, 0
    %472 = vmatpush.msra.mxu0 0.0
    %473 = vmatpush.msra.mxu0 0.0
    %474 = vmatpush.msra.mxu0 0.0
    %475 = vmatpush.msra.mxu0 0.0
    %476 = vmatpush.msra.mxu0 0.0
    %477 = vmatpush.msra.mxu0 0.0
    %478 = vmatpush.msra.mxu0 0.0
    %479 = vmatpush.msra.mxu0 0.0
    %480 = vmatpush.msra.mxu0 0.0
    %481 = vmatpush.msra.mxu0 0.0
    %482 = vmatpush.msra.mxu0 0.0
    %483 = vmatpush.msra.mxu0 0.0
    %484 = vmatpush.msra.mxu0 %v127
    %485 = vmatpush.msra.mxu0 %v126
    %486 = vmatpush.msra.mxu0 %v125
    %487 = vmatpush.msra.mxu0 %v124
    %488 = vmatmul.f32.gmra.mxu0 %v470
    %v489 = vpop.f32.mrf.mxu0
    %v490 = vadd.f32 0.0, %v489
    %491 = vdwg.mxu0
    %v492 = vadd.f32 %v468, %v490
    %v493 = vxor.u32 %v492, 2147483648
    %v494 = vmul.f32 %v493, 1.442695
    %v495 = vpow.pop %v494
    %v496 = vadd.f32 %v495, 1.0
    %v497 = vrcp.pop %v496
    %v498 = vmul.f32 %v496, %v497
    %v499 = vsub.f32 1.0, %v498
    %v500 = vmul.f32 %v497, %v499
    %v501 = vadd.f32 %v497, %v500
    %vm502 = vweird.f32 %v496
    %vm503 = vweird.f32 %v497
    %vm504 = vmor %vm502, %vm503
    %v505 = vsel %vm504, %v497, %v501
    %v506 = vand.u32 2147483647, %v496
    %vm507 = vcmp.eq.f32.partialorder %v506, 8.507059e+37
    %v508 = vand.u32 %v496, 2147483648
    %v509 = vor.u32 1.1754944e-38, %v508
    %v510 = vsel %vm507, %v509, %v505
    %v511 = vmul.f32 1.0, %v510
    %v512 = vtanh.pop %v492
    %v513 = vmul.f32 %v511, %v374
    %515 = vrot.lane.b32.xlu0 %v512, 32
    %v516 = vpop.permute.xlu0 %515
    %v518 = vmul.f32 %v511, %v516
    %520 = vrot.lane.b32.xlu0 %v518, 32
    %v521 = vpop.permute.xlu0 %520
    %v523 = vadd.f32 %v513, %v521
    %v524 = vtanh.pop %v523
    %526 = vrot.lane.b32.xlu0 %v524, 32
    %v527 = vpop.permute.xlu0 %526
    %v529 = vmul.f32 %v511, %v527
    %531 = vrot.lane.b32.xlu0 %v529, 64
    %v532 = vpop.permute.xlu0 %531
    %534 = vst.msk [vmem:[#allocation3 + $0x8] sm:$0xff] %vm222, %v532
    %v535 = vld [vmem:[#allocation2 + $0x10] sm:$0xff]
    %536 = vmatpush.msra.mxu0 0.0
    %537 = vmatpush.msra.mxu0 0.0
    %538 = vmatpush.msra.mxu0 0.0
    %539 = vmatpush.msra.mxu0 0.0
    %540 = vmatpush.msra.mxu0 0.0
    %541 = vmatpush.msra.mxu0 0.0
    %542 = vmatpush.msra.mxu0 0.0
    %543 = vmatpush.msra.mxu0 0.0
    %544 = vmatpush.msra.mxu0 0.0
    %545 = vmatpush.msra.mxu0 0.0
    %546 = vmatpush.msra.mxu0 0.0
    %547 = vmatpush.msra.mxu0 0.0
    %548 = vmatpush.msra.mxu0 %v123
    %549 = vmatpush.msra.mxu0 %v122
    %550 = vmatpush.msra.mxu0 %v121
    %551 = vmatpush.msra.mxu0 %v120
    %552 = vmatmul.f32.gmra.mxu0 %v448
    %v553 = vpop.f32.mrf.mxu0
    %v554 = vadd.f32 0.0, %v553
    %555 = vdwg.mxu0
    %v556 = vadd.f32 %v535, %v554
    %v557 = vxor.u32 %v556, 2147483648
    %v558 = vmul.f32 %v557, 1.442695
    %v559 = vpow.pop %v558
    %v560 = vadd.f32 %v559, 1.0
    %v561 = vrcp.pop %v560
    %v562 = vmul.f32 %v560, %v561
    %v563 = vsub.f32 1.0, %v562
    %v564 = vmul.f32 %v561, %v563
    %v565 = vadd.f32 %v561, %v564
    %vm566 = vweird.f32 %v560
    %vm567 = vweird.f32 %v561
    %vm568 = vmor %vm566, %vm567
    %v569 = vsel %vm568, %v561, %v565
    %v570 = vand.u32 2147483647, %v560
    %vm571 = vcmp.eq.f32.partialorder %v570, 8.507059e+37
    %v572 = vand.u32 %v560, 2147483648
    %v573 = vor.u32 1.1754944e-38, %v572
    %v574 = vsel %vm571, %v573, %v569
    %v575 = vmul.f32 1.0, %v574
    %v576 = vtanh.pop %v556
    %v577 = vmul.f32 %v575, %v438
    %579 = vrot.lane.b32.xlu0 %v576, 32
    %v580 = vpop.permute.xlu0 %579
    %v582 = vmul.f32 %v575, %v580
    %584 = vrot.lane.b32.xlu0 %v582, 32
    %v585 = vpop.permute.xlu0 %584
    %v587 = vadd.f32 %v577, %v585
    %v588 = vtanh.pop %v587
    %590 = vrot.lane.b32.xlu0 %v588, 32
    %v591 = vpop.permute.xlu0 %590
    %v593 = vmul.f32 %v575, %v591
    %595 = vrot.lane.b32.xlu0 %v593, 64
    %v596 = vpop.permute.xlu0 %595
    %v597 = vsel %vm222, %v596, 0
    %599 = vmatpush.msra.mxu0 0.0
    %600 = vmatpush.msra.mxu0 0.0
    %601 = vmatpush.msra.mxu0 0.0
    %602 = vmatpush.msra.mxu0 0.0
    %603 = vmatpush.msra.mxu0 0.0
    %604 = vmatpush.msra.mxu0 0.0
    %605 = vmatpush.msra.mxu0 0.0
    %606 = vmatpush.msra.mxu0 0.0
    %607 = vmatpush.msra.mxu0 0.0
    %608 = vmatpush.msra.mxu0 0.0
    %609 = vmatpush.msra.mxu0 0.0
    %610 = vmatpush.msra.mxu0 0.0
    %611 = vmatpush.msra.mxu0 %v119
    %612 = vmatpush.msra.mxu0 %v118
    %613 = vmatpush.msra.mxu0 %v117
    %614 = vmatpush.msra.mxu0 %v116
    %615 = vmatmul.f32.gmra.mxu0 %v597
    %v616 = vpop.f32.mrf.mxu0
    %v617 = vadd.f32 %v289, %v616
    %618 = vdwg.mxu0
    %v619 = vsel %vm222, %v532, 0
    %621 = vmatpush.msra.mxu0 0.0
    %622 = vmatpush.msra.mxu0 0.0
    %623 = vmatpush.msra.mxu0 0.0
    %624 = vmatpush.msra.mxu0 0.0
    %625 = vmatpush.msra.mxu0 0.0
    %626 = vmatpush.msra.mxu0 0.0
    %627 = vmatpush.msra.mxu0 0.0
    %628 = vmatpush.msra.mxu0 0.0
    %629 = vmatpush.msra.mxu0 0.0
    %630 = vmatpush.msra.mxu0 0.0
    %631 = vmatpush.msra.mxu0 0.0
    %632 = vmatpush.msra.mxu0 0.0
    %633 = vmatpush.msra.mxu0 %v127
    %634 = vmatpush.msra.mxu0 %v126
    %635 = vmatpush.msra.mxu0 %v125
    %636 = vmatpush.msra.mxu0 %v124
    %637 = vmatmul.f32.gmra.mxu0 %v619
    %v638 = vpop.f32.mrf.mxu0
    %v639 = vadd.f32 0.0, %v638
    %640 = vdwg.mxu0
    %v641 = vadd.f32 %v617, %v639
    %v642 = vxor.u32 %v641, 2147483648
    %v643 = vmul.f32 %v642, 1.442695
    %v644 = vpow.pop %v643
    %v645 = vadd.f32 %v644, 1.0
    %v646 = vrcp.pop %v645
    %v647 = vmul.f32 %v645, %v646
    %v648 = vsub.f32 1.0, %v647
    %v649 = vmul.f32 %v646, %v648
    %v650 = vadd.f32 %v646, %v649
    %vm651 = vweird.f32 %v645
    %vm652 = vweird.f32 %v646
    %vm653 = vmor %vm651, %vm652
    %v654 = vsel %vm653, %v646, %v650
    %v655 = vand.u32 2147483647, %v645
    %vm656 = vcmp.eq.f32.partialorder %v655, 8.507059e+37
    %v657 = vand.u32 %v645, 2147483648
    %v658 = vor.u32 1.1754944e-38, %v657
    %v659 = vsel %vm656, %v658, %v654
    %v660 = vmul.f32 1.0, %v659
    %v661 = vtanh.pop %v641
    %v662 = vmul.f32 %v660, %v523
    %664 = vrot.lane.b32.xlu0 %v661, 32
    %v665 = vpop.permute.xlu0 %664
    %v667 = vmul.f32 %v660, %v665
    %669 = vrot.lane.b32.xlu0 %v667, 32
    %v670 = vpop.permute.xlu0 %669
    %v672 = vadd.f32 %v662, %v670
    %v673 = vtanh.pop %v672
    %675 = vrot.lane.b32.xlu0 %v673, 32
    %v676 = vpop.permute.xlu0 %675
    %v678 = vmul.f32 %v660, %v676
    %680 = vrot.lane.b32.xlu0 %v678, 64
    %v681 = vpop.permute.xlu0 %680
    %683 = vst.msk [vmem:[#allocation3 + $0x10] sm:$0xff] %vm222, %v681
    %v684 = vld [vmem:[#allocation2 + $0x18] sm:$0xff]
    %685 = vmatpush.msra.mxu0 0.0
    %686 = vmatpush.msra.mxu0 0.0
    %687 = vmatpush.msra.mxu0 0.0
    %688 = vmatpush.msra.mxu0 0.0
    %689 = vmatpush.msra.mxu0 0.0
    %690 = vmatpush.msra.mxu0 0.0
    %691 = vmatpush.msra.mxu0 0.0
    %692 = vmatpush.msra.mxu0 0.0
    %693 = vmatpush.msra.mxu0 0.0
    %694 = vmatpush.msra.mxu0 0.0
    %695 = vmatpush.msra.mxu0 0.0
    %696 = vmatpush.msra.mxu0 0.0
    %697 = vmatpush.msra.mxu0 %v123
    %698 = vmatpush.msra.mxu0 %v122
    %699 = vmatpush.msra.mxu0 %v121
    %700 = vmatpush.msra.mxu0 %v120
    %701 = vmatmul.f32.gmra.mxu0 %v597
    %v702 = vpop.f32.mrf.mxu0
    %v703 = vadd.f32 0.0, %v702
    %704 = vdwg.mxu0
    %v705 = vadd.f32 %v684, %v703
    %v706 = vxor.u32 %v705, 2147483648
    %v707 = vmul.f32 %v706, 1.442695
    %v708 = vpow.pop %v707
    %v709 = vadd.f32 %v708, 1.0
    %v710 = vrcp.pop %v709
    %v711 = vmul.f32 %v709, %v710
    %v712 = vsub.f32 1.0, %v711
    %v713 = vmul.f32 %v710, %v712
    %v714 = vadd.f32 %v710, %v713
    %vm715 = vweird.f32 %v709
    %vm716 = vweird.f32 %v710
    %vm717 = vmor %vm715, %vm716
    %v718 = vsel %vm717, %v710, %v714
    %v719 = vand.u32 2147483647, %v709
    %vm720 = vcmp.eq.f32.partialorder %v719, 8.507059e+37
    %v721 = vand.u32 %v709, 2147483648
    %v722 = vor.u32 1.1754944e-38, %v721
    %v723 = vsel %vm720, %v722, %v718
    %v724 = vmul.f32 1.0, %v723
    %v725 = vtanh.pop %v705
    %v726 = vmul.f32 %v724, %v587
    %728 = vrot.lane.b32.xlu0 %v725, 32
    %v729 = vpop.permute.xlu0 %728
    %v731 = vmul.f32 %v724, %v729
    %733 = vrot.lane.b32.xlu0 %v731, 32
    %v734 = vpop.permute.xlu0 %733
    %v736 = vadd.f32 %v726, %v734
    %v737 = vtanh.pop %v736
    %739 = vrot.lane.b32.xlu0 %v737, 32
    %v740 = vpop.permute.xlu0 %739
    %v742 = vmul.f32 %v724, %v740
    %744 = vrot.lane.b32.xlu0 %v742, 64
    %v745 = vpop.permute.xlu0 %744
    %v746 = vsel %vm222, %v745, 0
    %748 = vmatpush.msra.mxu0 0.0
    %749 = vmatpush.msra.mxu0 0.0
    %750 = vmatpush.msra.mxu0 0.0
    %751 = vmatpush.msra.mxu0 0.0
    %752 = vmatpush.msra.mxu0 0.0
    %753 = vmatpush.msra.mxu0 0.0
    %754 = vmatpush.msra.mxu0 0.0
    %755 = vmatpush.msra.mxu0 0.0
    %756 = vmatpush.msra.mxu0 0.0
    %757 = vmatpush.msra.mxu0 0.0
    %758 = vmatpush.msra.mxu0 0.0
    %759 = vmatpush.msra.mxu0 0.0
    %760 = vmatpush.msra.mxu0 %v119
    %761 = vmatpush.msra.mxu0 %v118
    %762 = vmatpush.msra.mxu0 %v117
    %763 = vmatpush.msra.mxu0 %v116
    %764 = vmatmul.f32.gmra.mxu0 %v746
    %v765 = vpop.f32.mrf.mxu0
    %v766 = vadd.f32 %v289, %v765
    %767 = vdwg.mxu0
    %v768 = vsel %vm222, %v681, 0
    %770 = vmatpush.msra.mxu0 0.0
    %771 = vmatpush.msra.mxu0 0.0
    %772 = vmatpush.msra.mxu0 0.0
    %773 = vmatpush.msra.mxu0 0.0
    %774 = vmatpush.msra.mxu0 0.0
    %775 = vmatpush.msra.mxu0 0.0
    %776 = vmatpush.msra.mxu0 0.0
    %777 = vmatpush.msra.mxu0 0.0
    %778 = vmatpush.msra.mxu0 0.0
    %779 = vmatpush.msra.mxu0 0.0
    %780 = vmatpush.msra.mxu0 0.0
    %781 = vmatpush.msra.mxu0 0.0
    %782 = vmatpush.msra.mxu0 %v127
    %783 = vmatpush.msra.mxu0 %v126
    %784 = vmatpush.msra.mxu0 %v125
    %785 = vmatpush.msra.mxu0 %v124
    %786 = vmatmul.f32.gmra.mxu0 %v768
    %v787 = vpop.f32.mrf.mxu0
    %v788 = vadd.f32 0.0, %v787
    %789 = vdwg.mxu0
    %v790 = vadd.f32 %v766, %v788
    %v791 = vxor.u32 %v790, 2147483648
    %v792 = vmul.f32 %v791, 1.442695
    %v793 = vpow.pop %v792
    %v794 = vadd.f32 %v793, 1.0
    %v795 = vrcp.pop %v794
    %v796 = vmul.f32 %v794, %v795
    %v797 = vsub.f32 1.0, %v796
    %v798 = vmul.f32 %v795, %v797
    %v799 = vadd.f32 %v795, %v798
    %vm800 = vweird.f32 %v794
    %vm801 = vweird.f32 %v795
    %vm802 = vmor %vm800, %vm801
    %v803 = vsel %vm802, %v795, %v799
    %v804 = vand.u32 2147483647, %v794
    %vm805 = vcmp.eq.f32.partialorder %v804, 8.507059e+37
    %v806 = vand.u32 %v794, 2147483648
    %v807 = vor.u32 1.1754944e-38, %v806
    %v808 = vsel %vm805, %v807, %v803
    %v809 = vmul.f32 1.0, %v808
    %v810 = vtanh.pop %v790
    %v811 = vmul.f32 %v809, %v672
    %813 = vrot.lane.b32.xlu0 %v810, 32
    %v814 = vpop.permute.xlu0 %813
    %v816 = vmul.f32 %v809, %v814
    %818 = vrot.lane.b32.xlu0 %v816, 32
    %v819 = vpop.permute.xlu0 %818
    %v821 = vadd.f32 %v811, %v819
    %v822 = vtanh.pop %v821
    %824 = vrot.lane.b32.xlu0 %v822, 32
    %v825 = vpop.permute.xlu0 %824
    %v827 = vmul.f32 %v809, %v825
    %829 = vrot.lane.b32.xlu0 %v827, 64
    %v830 = vpop.permute.xlu0 %829
    %832 = vst.msk [vmem:[#allocation3 + $0x18] sm:$0xff] %vm222, %v830
    %v833 = vld [vmem:[#allocation2 + $0x20] sm:$0xff]
    %834 = vmatpush.msra.mxu0 0.0
    %835 = vmatpush.msra.mxu0 0.0
    %836 = vmatpush.msra.mxu0 0.0
    %837 = vmatpush.msra.mxu0 0.0
    %838 = vmatpush.msra.mxu0 0.0
    %839 = vmatpush.msra.mxu0 0.0
    %840 = vmatpush.msra.mxu0 0.0
    %841 = vmatpush.msra.mxu0 0.0
    %842 = vmatpush.msra.mxu0 0.0
    %843 = vmatpush.msra.mxu0 0.0
    %844 = vmatpush.msra.mxu0 0.0
    %845 = vmatpush.msra.mxu0 0.0
    %846 = vmatpush.msra.mxu0 %v123
    %847 = vmatpush.msra.mxu0 %v122
    %848 = vmatpush.msra.mxu0 %v121
    %849 = vmatpush.msra.mxu0 %v120
    %850 = vmatmul.f32.gmra.mxu0 %v746
    %v851 = vpop.f32.mrf.mxu0
    %v852 = vadd.f32 0.0, %v851
    %853 = vdwg.mxu0
    %v854 = vadd.f32 %v833, %v852
    %v855 = vxor.u32 %v854, 2147483648
    %v856 = vmul.f32 %v855, 1.442695
    %v857 = vpow.pop %v856
    %v858 = vadd.f32 %v857, 1.0
    %v859 = vrcp.pop %v858
    %v860 = vmul.f32 %v858, %v859
    %v861 = vsub.f32 1.0, %v860
    %v862 = vmul.f32 %v859, %v861
    %v863 = vadd.f32 %v859, %v862
    %vm864 = vweird.f32 %v858
    %vm865 = vweird.f32 %v859
    %vm866 = vmor %vm864, %vm865
    %v867 = vsel %vm866, %v859, %v863
    %v868 = vand.u32 2147483647, %v858
    %vm869 = vcmp.eq.f32.partialorder %v868, 8.507059e+37
    %v870 = vand.u32 %v858, 2147483648
    %v871 = vor.u32 1.1754944e-38, %v870
    %v872 = vsel %vm869, %v871, %v867
    %v873 = vmul.f32 1.0, %v872
    %v874 = vtanh.pop %v854
    %v875 = vmul.f32 %v873, %v736
    %877 = vrot.lane.b32.xlu0 %v874, 32
    %v878 = vpop.permute.xlu0 %877
    %v880 = vmul.f32 %v873, %v878
    %882 = vrot.lane.b32.xlu0 %v880, 32
    %v883 = vpop.permute.xlu0 %882
    %v885 = vadd.f32 %v875, %v883
    %v886 = vtanh.pop %v885
    %888 = vrot.lane.b32.xlu0 %v886, 32
    %v889 = vpop.permute.xlu0 %888
    %v891 = vmul.f32 %v873, %v889
    %893 = vrot.lane.b32.xlu0 %v891, 64
    %v894 = vpop.permute.xlu0 %893
    %v895 = vsel %vm222, %v894, 0
    %897 = vmatpush.msra.mxu0 0.0
    %898 = vmatpush.msra.mxu0 0.0
    %899 = vmatpush.msra.mxu0 0.0
    %900 = vmatpush.msra.mxu0 0.0
    %901 = vmatpush.msra.mxu0 0.0
    %902 = vmatpush.msra.mxu0 0.0
    %903 = vmatpush.msra.mxu0 0.0
    %904 = vmatpush.msra.mxu0 0.0
    %905 = vmatpush.msra.mxu0 0.0
    %906 = vmatpush.msra.mxu0 0.0
    %907 = vmatpush.msra.mxu0 0.0
    %908 = vmatpush.msra.mxu0 0.0
    %909 = vmatpush.msra.mxu0 %v119
    %910 = vmatpush.msra.mxu0 %v118
    %911 = vmatpush.msra.mxu0 %v117
    %912 = vmatpush.msra.mxu0 %v116
    %913 = vmatmul.f32.gmra.mxu0 %v895
    %v914 = vpop.f32.mrf.mxu0
    %v915 = vadd.f32 %v289, %v914
    %916 = vdwg.mxu0
    %v917 = vsel %vm222, %v830, 0
    %919 = vmatpush.msra.mxu0 0.0
    %920 = vmatpush.msra.mxu0 0.0
    %921 = vmatpush.msra.mxu0 0.0
    %922 = vmatpush.msra.mxu0 0.0
    %923 = vmatpush.msra.mxu0 0.0
    %924 = vmatpush.msra.mxu0 0.0
    %925 = vmatpush.msra.mxu0 0.0
    %926 = vmatpush.msra.mxu0 0.0
    %927 = vmatpush.msra.mxu0 0.0
    %928 = vmatpush.msra.mxu0 0.0
    %929 = vmatpush.msra.mxu0 0.0
    %930 = vmatpush.msra.mxu0 0.0
    %931 = vmatpush.msra.mxu0 %v127
    %932 = vmatpush.msra.mxu0 %v126
    %933 = vmatpush.msra.mxu0 %v125
    %934 = vmatpush.msra.mxu0 %v124
    %935 = vmatmul.f32.gmra.mxu0 %v917
    %v936 = vpop.f32.mrf.mxu0
    %v937 = vadd.f32 0.0, %v936
    %938 = vdwg.mxu0
    %v939 = vadd.f32 %v915, %v937
    %v940 = vxor.u32 %v939, 2147483648
    %v941 = vmul.f32 %v940, 1.442695
    %v942 = vpow.pop %v941
    %v943 = vadd.f32 %v942, 1.0
    %v944 = vrcp.pop %v943
    %v945 = vmul.f32 %v943, %v944
    %v946 = vsub.f32 1.0, %v945
    %v947 = vmul.f32 %v944, %v946
    %v948 = vadd.f32 %v944, %v947
    %vm949 = vweird.f32 %v943
    %vm950 = vweird.f32 %v944
    %vm951 = vmor %vm949, %vm950
    %v952 = vsel %vm951, %v944, %v948
    %v953 = vand.u32 2147483647, %v943
    %vm954 = vcmp.eq.f32.partialorder %v953, 8.507059e+37
    %v955 = vand.u32 %v943, 2147483648
    %v956 = vor.u32 1.1754944e-38, %v955
    %v957 = vsel %vm954, %v956, %v952
    %v958 = vmul.f32 1.0, %v957
    %v959 = vtanh.pop %v939
    %v960 = vmul.f32 %v958, %v821
    %962 = vrot.lane.b32.xlu0 %v959, 32
    %v963 = vpop.permute.xlu0 %962
    %v965 = vmul.f32 %v958, %v963
    %967 = vrot.lane.b32.xlu0 %v965, 32
    %v968 = vpop.permute.xlu0 %967
    %v970 = vadd.f32 %v960, %v968
    %v971 = vtanh.pop %v970
    %973 = vrot.lane.b32.xlu0 %v971, 32
    %v974 = vpop.permute.xlu0 %973
    %v976 = vmul.f32 %v958, %v974
    %978 = vrot.lane.b32.xlu0 %v976, 64
    %v979 = vpop.permute.xlu0 %978
    %981 = vst.msk [vmem:[#allocation3 + $0x20] sm:$0xff] %vm222, %v979
    %v982 = vld [vmem:[#allocation2 + $0x28] sm:$0xff]
    %983 = vmatpush.msra.mxu0 0.0
    %984 = vmatpush.msra.mxu0 0.0
    %985 = vmatpush.msra.mxu0 0.0
    %986 = vmatpush.msra.mxu0 0.0
    %987 = vmatpush.msra.mxu0 0.0
    %988 = vmatpush.msra.mxu0 0.0
    %989 = vmatpush.msra.mxu0 0.0
    %990 = vmatpush.msra.mxu0 0.0
    %991 = vmatpush.msra.mxu0 0.0
    %992 = vmatpush.msra.mxu0 0.0
    %993 = vmatpush.msra.mxu0 0.0
    %994 = vmatpush.msra.mxu0 0.0
    %995 = vmatpush.msra.mxu0 %v123
    %996 = vmatpush.msra.mxu0 %v122
    %997 = vmatpush.msra.mxu0 %v121
    %998 = vmatpush.msra.mxu0 %v120
    %999 = vmatmul.f32.gmra.mxu0 %v895
    %v1000 = vpop.f32.mrf.mxu0
    %v1001 = vadd.f32 0.0, %v1000
    %1002 = vdwg.mxu0
    %v1003 = vadd.f32 %v982, %v1001
    %v1004 = vxor.u32 %v1003, 2147483648
    %v1005 = vmul.f32 %v1004, 1.442695
    %v1006 = vpow.pop %v1005
    %v1007 = vadd.f32 %v1006, 1.0
    %v1008 = vrcp.pop %v1007
    %v1009 = vmul.f32 %v1007, %v1008
    %v1010 = vsub.f32 1.0, %v1009
    %v1011 = vmul.f32 %v1008, %v1010
    %v1012 = vadd.f32 %v1008, %v1011
    %vm1013 = vweird.f32 %v1007
    %vm1014 = vweird.f32 %v1008
    %vm1015 = vmor %vm1013, %vm1014
    %v1016 = vsel %vm1015, %v1008, %v1012
    %v1017 = vand.u32 2147483647, %v1007
    %vm1018 = vcmp.eq.f32.partialorder %v1017, 8.507059e+37
    %v1019 = vand.u32 %v1007, 2147483648
    %v1020 = vor.u32 1.1754944e-38, %v1019
    %v1021 = vsel %vm1018, %v1020, %v1016
    %v1022 = vmul.f32 1.0, %v1021
    %v1023 = vtanh.pop %v1003
    %v1024 = vmul.f32 %v1022, %v885
    %1026 = vrot.lane.b32.xlu0 %v1023, 32
    %v1027 = vpop.permute.xlu0 %1026
    %v1029 = vmul.f32 %v1022, %v1027
    %1031 = vrot.lane.b32.xlu0 %v1029, 32
    %v1032 = vpop.permute.xlu0 %1031
    %v1034 = vadd.f32 %v1024, %v1032
    %v1035 = vtanh.pop %v1034
    %1037 = vrot.lane.b32.xlu0 %v1035, 32
    %v1038 = vpop.permute.xlu0 %1037
    %v1040 = vmul.f32 %v1022, %v1038
    %1042 = vrot.lane.b32.xlu0 %v1040, 64
    %v1043 = vpop.permute.xlu0 %1042
    %v1044 = vsel %vm222, %v1043, 0
    %1046 = vmatpush.msra.mxu0 0.0
    %1047 = vmatpush.msra.mxu0 0.0
    %1048 = vmatpush.msra.mxu0 0.0
    %1049 = vmatpush.msra.mxu0 0.0
    %1050 = vmatpush.msra.mxu0 0.0
    %1051 = vmatpush.msra.mxu0 0.0
    %1052 = vmatpush.msra.mxu0 0.0
    %1053 = vmatpush.msra.mxu0 0.0
    %1054 = vmatpush.msra.mxu0 0.0
    %1055 = vmatpush.msra.mxu0 0.0
    %1056 = vmatpush.msra.mxu0 0.0
    %1057 = vmatpush.msra.mxu0 0.0
    %1058 = vmatpush.msra.mxu0 %v119
    %1059 = vmatpush.msra.mxu0 %v118
    %1060 = vmatpush.msra.mxu0 %v117
    %1061 = vmatpush.msra.mxu0 %v116
    %1062 = vmatmul.f32.gmra.mxu0 %v1044
    %v1063 = vpop.f32.mrf.mxu0
    %v1064 = vadd.f32 %v289, %v1063
    %1065 = vdwg.mxu0
    %v1066 = vsel %vm222, %v979, 0
    %1068 = vmatpush.msra.mxu0 0.0
    %1069 = vmatpush.msra.mxu0 0.0
    %1070 = vmatpush.msra.mxu0 0.0
    %1071 = vmatpush.msra.mxu0 0.0
    %1072 = vmatpush.msra.mxu0 0.0
    %1073 = vmatpush.msra.mxu0 0.0
    %1074 = vmatpush.msra.mxu0 0.0
    %1075 = vmatpush.msra.mxu0 0.0
    %1076 = vmatpush.msra.mxu0 0.0
    %1077 = vmatpush.msra.mxu0 0.0
    %1078 = vmatpush.msra.mxu0 0.0
    %1079 = vmatpush.msra.mxu0 0.0
    %1080 = vmatpush.msra.mxu0 %v127
    %1081 = vmatpush.msra.mxu0 %v126
    %1082 = vmatpush.msra.mxu0 %v125
    %1083 = vmatpush.msra.mxu0 %v124
    %1084 = vmatmul.f32.gmra.mxu0 %v1066
    %v1085 = vpop.f32.mrf.mxu0
    %v1086 = vadd.f32 0.0, %v1085
    %1087 = vdwg.mxu0
    %v1088 = vadd.f32 %v1064, %v1086
    %v1089 = vxor.u32 %v1088, 2147483648
    %v1090 = vmul.f32 %v1089, 1.442695
    %v1091 = vpow.pop %v1090
    %v1092 = vadd.f32 %v1091, 1.0
    %v1093 = vrcp.pop %v1092
    %v1094 = vmul.f32 %v1092, %v1093
    %v1095 = vsub.f32 1.0, %v1094
    %v1096 = vmul.f32 %v1093, %v1095
    %v1097 = vadd.f32 %v1093, %v1096
    %vm1098 = vweird.f32 %v1092
    %vm1099 = vweird.f32 %v1093
    %vm1100 = vmor %vm1098, %vm1099
    %v1101 = vsel %vm1100, %v1093, %v1097
    %v1102 = vand.u32 2147483647, %v1092
    %vm1103 = vcmp.eq.f32.partialorder %v1102, 8.507059e+37
    %v1104 = vand.u32 %v1092, 2147483648
    %v1105 = vor.u32 1.1754944e-38, %v1104
    %v1106 = vsel %vm1103, %v1105, %v1101
    %v1107 = vmul.f32 1.0, %v1106
    %v1108 = vtanh.pop %v1088
    %v1109 = vmul.f32 %v1107, %v970
    %1111 = vrot.lane.b32.xlu0 %v1108, 32
    %v1112 = vpop.permute.xlu0 %1111
    %v1114 = vmul.f32 %v1107, %v1112
    %1116 = vrot.lane.b32.xlu0 %v1114, 32
    %v1117 = vpop.permute.xlu0 %1116
    %v1119 = vadd.f32 %v1109, %v1117
    %v1120 = vtanh.pop %v1119
    %1122 = vrot.lane.b32.xlu0 %v1120, 32
    %v1123 = vpop.permute.xlu0 %1122
    %v1125 = vmul.f32 %v1107, %v1123
    %1127 = vrot.lane.b32.xlu0 %v1125, 64
    %v1128 = vpop.permute.xlu0 %1127
    %1130 = vst.msk [vmem:[#allocation3 + $0x28] sm:$0xff] %vm222, %v1128
    %v1131 = vld [vmem:[#allocation2 + $0x30] sm:$0xff]
    %1132 = vmatpush.msra.mxu0 0.0
    %1133 = vmatpush.msra.mxu0 0.0
    %1134 = vmatpush.msra.mxu0 0.0
    %1135 = vmatpush.msra.mxu0 0.0
    %1136 = vmatpush.msra.mxu0 0.0
    %1137 = vmatpush.msra.mxu0 0.0
    %1138 = vmatpush.msra.mxu0 0.0
    %1139 = vmatpush.msra.mxu0 0.0
    %1140 = vmatpush.msra.mxu0 0.0
    %1141 = vmatpush.msra.mxu0 0.0
    %1142 = vmatpush.msra.mxu0 0.0
    %1143 = vmatpush.msra.mxu0 0.0
    %1144 = vmatpush.msra.mxu0 %v123
    %1145 = vmatpush.msra.mxu0 %v122
    %1146 = vmatpush.msra.mxu0 %v121
    %1147 = vmatpush.msra.mxu0 %v120
    %1148 = vmatmul.f32.gmra.mxu0 %v1044
    %v1149 = vpop.f32.mrf.mxu0
    %v1150 = vadd.f32 0.0, %v1149
    %1151 = vdwg.mxu0
    %v1152 = vadd.f32 %v1131, %v1150
    %v1153 = vxor.u32 %v1152, 2147483648
    %v1154 = vmul.f32 %v1153, 1.442695
    %v1155 = vpow.pop %v1154
    %v1156 = vadd.f32 %v1155, 1.0
    %v1157 = vrcp.pop %v1156
    %v1158 = vmul.f32 %v1156, %v1157
    %v1159 = vsub.f32 1.0, %v1158
    %v1160 = vmul.f32 %v1157, %v1159
    %v1161 = vadd.f32 %v1157, %v1160
    %vm1162 = vweird.f32 %v1156
    %vm1163 = vweird.f32 %v1157
    %vm1164 = vmor %vm1162, %vm1163
    %v1165 = vsel %vm1164, %v1157, %v1161
    %v1166 = vand.u32 2147483647, %v1156
    %vm1167 = vcmp.eq.f32.partialorder %v1166, 8.507059e+37
    %v1168 = vand.u32 %v1156, 2147483648
    %v1169 = vor.u32 1.1754944e-38, %v1168
    %v1170 = vsel %vm1167, %v1169, %v1165
    %v1171 = vmul.f32 1.0, %v1170
    %v1172 = vtanh.pop %v1152
    %v1173 = vmul.f32 %v1171, %v1034
    %1175 = vrot.lane.b32.xlu0 %v1172, 32
    %v1176 = vpop.permute.xlu0 %1175
    %v1178 = vmul.f32 %v1171, %v1176
    %1180 = vrot.lane.b32.xlu0 %v1178, 32
    %v1181 = vpop.permute.xlu0 %1180
    %v1183 = vadd.f32 %v1173, %v1181
    %v1184 = vtanh.pop %v1183
    %1186 = vrot.lane.b32.xlu0 %v1184, 32
    %v1187 = vpop.permute.xlu0 %1186
    %v1189 = vmul.f32 %v1171, %v1187
    %1191 = vrot.lane.b32.xlu0 %v1189, 64
    %v1192 = vpop.permute.xlu0 %1191
    %v1193 = vsel %vm222, %v1192, 0
    %1195 = vmatpush.msra.mxu0 0.0
    %1196 = vmatpush.msra.mxu0 0.0
    %1197 = vmatpush.msra.mxu0 0.0
    %1198 = vmatpush.msra.mxu0 0.0
    %1199 = vmatpush.msra.mxu0 0.0
    %1200 = vmatpush.msra.mxu0 0.0
    %1201 = vmatpush.msra.mxu0 0.0
    %1202 = vmatpush.msra.mxu0 0.0
    %1203 = vmatpush.msra.mxu0 0.0
    %1204 = vmatpush.msra.mxu0 0.0
    %1205 = vmatpush.msra.mxu0 0.0
    %1206 = vmatpush.msra.mxu0 0.0
    %1207 = vmatpush.msra.mxu0 %v119
    %1208 = vmatpush.msra.mxu0 %v118
    %1209 = vmatpush.msra.mxu0 %v117
    %1210 = vmatpush.msra.mxu0 %v116
    %1211 = vmatmul.f32.gmra.mxu0 %v1193
    %v1212 = vpop.f32.mrf.mxu0
    %v1213 = vadd.f32 %v289, %v1212
    %1214 = vdwg.mxu0
    %v1215 = vsel %vm222, %v1128, 0
    %1217 = vmatpush.msra.mxu0 0.0
    %1218 = vmatpush.msra.mxu0 0.0
    %1219 = vmatpush.msra.mxu0 0.0
    %1220 = vmatpush.msra.mxu0 0.0
    %1221 = vmatpush.msra.mxu0 0.0
    %1222 = vmatpush.msra.mxu0 0.0
    %1223 = vmatpush.msra.mxu0 0.0
    %1224 = vmatpush.msra.mxu0 0.0
    %1225 = vmatpush.msra.mxu0 0.0
    %1226 = vmatpush.msra.mxu0 0.0
    %1227 = vmatpush.msra.mxu0 0.0
    %1228 = vmatpush.msra.mxu0 0.0
    %1229 = vmatpush.msra.mxu0 %v127
    %1230 = vmatpush.msra.mxu0 %v126
    %1231 = vmatpush.msra.mxu0 %v125
    %1232 = vmatpush.msra.mxu0 %v124
    %1233 = vmatmul.f32.gmra.mxu0 %v1215
    %v1234 = vpop.f32.mrf.mxu0
    %v1235 = vadd.f32 0.0, %v1234
    %1236 = vdwg.mxu0
    %v1237 = vadd.f32 %v1213, %v1235
    %v1238 = vxor.u32 %v1237, 2147483648
    %v1239 = vmul.f32 %v1238, 1.442695
    %v1240 = vpow.pop %v1239
    %v1241 = vadd.f32 %v1240, 1.0
    %v1242 = vrcp.pop %v1241
    %v1243 = vmul.f32 %v1241, %v1242
    %v1244 = vsub.f32 1.0, %v1243
    %v1245 = vmul.f32 %v1242, %v1244
    %v1246 = vadd.f32 %v1242, %v1245
    %vm1247 = vweird.f32 %v1241
    %vm1248 = vweird.f32 %v1242
    %vm1249 = vmor %vm1247, %vm1248
    %v1250 = vsel %vm1249, %v1242, %v1246
    %v1251 = vand.u32 2147483647, %v1241
    %vm1252 = vcmp.eq.f32.partialorder %v1251, 8.507059e+37
    %v1253 = vand.u32 %v1241, 2147483648
    %v1254 = vor.u32 1.1754944e-38, %v1253
    %v1255 = vsel %vm1252, %v1254, %v1250
    %v1256 = vmul.f32 1.0, %v1255
    %v1257 = vtanh.pop %v1237
    %v1258 = vmul.f32 %v1256, %v1119
    %1260 = vrot.lane.b32.xlu0 %v1257, 32
    %v1261 = vpop.permute.xlu0 %1260
    %v1263 = vmul.f32 %v1256, %v1261
    %1265 = vrot.lane.b32.xlu0 %v1263, 32
    %v1266 = vpop.permute.xlu0 %1265
    %v1268 = vadd.f32 %v1258, %v1266
    %v1269 = vtanh.pop %v1268
    %1271 = vrot.lane.b32.xlu0 %v1269, 32
    %v1272 = vpop.permute.xlu0 %1271
    %v1274 = vmul.f32 %v1256, %v1272
    %1276 = vrot.lane.b32.xlu0 %v1274, 64
    %v1277 = vpop.permute.xlu0 %1276
    %1279 = vst.msk [vmem:[#allocation3 + $0x30] sm:$0xff] %vm222, %v1277
    %v1280 = vld [vmem:[#allocation2 + $0x38] sm:$0xff]
    %1281 = vmatpush.msra.mxu0 0.0
    %1282 = vmatpush.msra.mxu0 0.0
    %1283 = vmatpush.msra.mxu0 0.0
    %1284 = vmatpush.msra.mxu0 0.0
    %1285 = vmatpush.msra.mxu0 0.0
    %1286 = vmatpush.msra.mxu0 0.0
    %1287 = vmatpush.msra.mxu0 0.0
    %1288 = vmatpush.msra.mxu0 0.0
    %1289 = vmatpush.msra.mxu0 0.0
    %1290 = vmatpush.msra.mxu0 0.0
    %1291 = vmatpush.msra.mxu0 0.0
    %1292 = vmatpush.msra.mxu0 0.0
    %1293 = vmatpush.msra.mxu0 %v123
    %1294 = vmatpush.msra.mxu0 %v122
    %1295 = vmatpush.msra.mxu0 %v121
    %1296 = vmatpush.msra.mxu0 %v120
    %1297 = vmatmul.f32.gmra.mxu0 %v1193
    %v1298 = vpop.f32.mrf.mxu0
    %v1299 = vadd.f32 0.0, %v1298
    %1300 = vdwg.mxu0
    %v1301 = vadd.f32 %v1280, %v1299
    %v1302 = vxor.u32 %v1301, 2147483648
    %v1303 = vmul.f32 %v1302, 1.442695
    %v1304 = vpow.pop %v1303
    %v1305 = vadd.f32 %v1304, 1.0
    %v1306 = vrcp.pop %v1305
    %v1307 = vmul.f32 %v1305, %v1306
    %v1308 = vsub.f32 1.0, %v1307
    %v1309 = vmul.f32 %v1306, %v1308
    %v1310 = vadd.f32 %v1306, %v1309
    %vm1311 = vweird.f32 %v1305
    %vm1312 = vweird.f32 %v1306
    %vm1313 = vmor %vm1311, %vm1312
    %v1314 = vsel %vm1313, %v1306, %v1310
    %v1315 = vand.u32 2147483647, %v1305
    %vm1316 = vcmp.eq.f32.partialorder %v1315, 8.507059e+37
    %v1317 = vand.u32 %v1305, 2147483648
    %v1318 = vor.u32 1.1754944e-38, %v1317
    %v1319 = vsel %vm1316, %v1318, %v1314
    %v1320 = vmul.f32 1.0, %v1319
    %v1321 = vtanh.pop %v1301
    %v1322 = vmul.f32 %v1320, %v1183
    %1324 = vrot.lane.b32.xlu0 %v1321, 32
    %v1325 = vpop.permute.xlu0 %1324
    %v1327 = vmul.f32 %v1320, %v1325
    %1329 = vrot.lane.b32.xlu0 %v1327, 32
    %v1330 = vpop.permute.xlu0 %1329
    %v1332 = vadd.f32 %v1322, %v1330
    %v1333 = vtanh.pop %v1332
    %1335 = vrot.lane.b32.xlu0 %v1333, 32
    %v1336 = vpop.permute.xlu0 %1335
    %v1338 = vmul.f32 %v1320, %v1336
    %1340 = vrot.lane.b32.xlu0 %v1338, 64
    %v1341 = vpop.permute.xlu0 %1340
    %v1342 = vsel %vm222, %v1341, 0
    %1344 = vmatpush.msra.mxu0 0.0
    %1345 = vmatpush.msra.mxu0 0.0
    %1346 = vmatpush.msra.mxu0 0.0
    %1347 = vmatpush.msra.mxu0 0.0
    %1348 = vmatpush.msra.mxu0 0.0
    %1349 = vmatpush.msra.mxu0 0.0
    %1350 = vmatpush.msra.mxu0 0.0
    %1351 = vmatpush.msra.mxu0 0.0
    %1352 = vmatpush.msra.mxu0 0.0
    %1353 = vmatpush.msra.mxu0 0.0
    %1354 = vmatpush.msra.mxu0 0.0
    %1355 = vmatpush.msra.mxu0 0.0
    %1356 = vmatpush.msra.mxu0 %v119
    %1357 = vmatpush.msra.mxu0 %v118
    %1358 = vmatpush.msra.mxu0 %v117
    %1359 = vmatpush.msra.mxu0 %v116
    %1360 = vmatmul.f32.gmra.mxu0 %v1342
    %v1361 = vpop.f32.mrf.mxu0
    %v1362 = vadd.f32 %v289, %v1361
    %1363 = vdwg.mxu0
    %v1364 = vsel %vm222, %v1277, 0
    %1366 = vmatpush.msra.mxu0 0.0
    %1367 = vmatpush.msra.mxu0 0.0
    %1368 = vmatpush.msra.mxu0 0.0
    %1369 = vmatpush.msra.mxu0 0.0
    %1370 = vmatpush.msra.mxu0 0.0
    %1371 = vmatpush.msra.mxu0 0.0
    %1372 = vmatpush.msra.mxu0 0.0
    %1373 = vmatpush.msra.mxu0 0.0
    %1374 = vmatpush.msra.mxu0 0.0
    %1375 = vmatpush.msra.mxu0 0.0
    %1376 = vmatpush.msra.mxu0 0.0
    %1377 = vmatpush.msra.mxu0 0.0
    %1378 = vmatpush.msra.mxu0 %v127
    %1379 = vmatpush.msra.mxu0 %v126
    %1380 = vmatpush.msra.mxu0 %v125
    %1381 = vmatpush.msra.mxu0 %v124
    %1382 = vmatmul.f32.gmra.mxu0 %v1364
    %v1383 = vpop.f32.mrf.mxu0
    %v1384 = vadd.f32 0.0, %v1383
    %1385 = vdwg.mxu0
    %v1386 = vadd.f32 %v1362, %v1384
    %v1387 = vxor.u32 %v1386, 2147483648
    %v1388 = vmul.f32 %v1387, 1.442695
    %v1389 = vpow.pop %v1388
    %v1390 = vadd.f32 %v1389, 1.0
    %v1391 = vrcp.pop %v1390
    %v1392 = vmul.f32 %v1390, %v1391
    %v1393 = vsub.f32 1.0, %v1392
    %v1394 = vmul.f32 %v1391, %v1393
    %v1395 = vadd.f32 %v1391, %v1394
    %vm1396 = vweird.f32 %v1390
    %vm1397 = vweird.f32 %v1391
    %vm1398 = vmor %vm1396, %vm1397
    %v1399 = vsel %vm1398, %v1391, %v1395
    %v1400 = vand.u32 2147483647, %v1390
    %vm1401 = vcmp.eq.f32.partialorder %v1400, 8.507059e+37
    %v1402 = vand.u32 %v1390, 2147483648
    %v1403 = vor.u32 1.1754944e-38, %v1402
    %v1404 = vsel %vm1401, %v1403, %v1399
    %v1405 = vmul.f32 1.0, %v1404
    %v1406 = vtanh.pop %v1386
    %v1407 = vmul.f32 %v1405, %v1268
    %1409 = vrot.lane.b32.xlu0 %v1406, 32
    %v1410 = vpop.permute.xlu0 %1409
    %v1412 = vmul.f32 %v1405, %v1410
    %1414 = vrot.lane.b32.xlu0 %v1412, 32
    %v1415 = vpop.permute.xlu0 %1414
    %v1417 = vadd.f32 %v1407, %v1415
    %v1418 = vtanh.pop %v1417
    %1420 = vrot.lane.b32.xlu0 %v1418, 32
    %v1421 = vpop.permute.xlu0 %1420
    %v1423 = vmul.f32 %v1405, %v1421
    %1425 = vrot.lane.b32.xlu0 %v1423, 64
    %v1426 = vpop.permute.xlu0 %1425
    %1428 = vst.msk [vmem:[#allocation3 + $0x38] sm:$0xff] %vm222, %v1426
    %1430 = vst.msk [vmem:[#allocation13] sm:$0xff] %vm222, %v1341
    %1432 = vrot.lane.b32.xlu0 %v1332, 96
    %v1433 = vpop.permute.xlu0 %1432
    %1435 = vst.msk [vmem:[#allocation14] sm:$0xff] %vm222, %v1433
    %s1436 = scalar_lea.vmem [#allocation13], 8
    %1437 = vst.msk [vmem:[%s1436] sm:$0xff] %vm222, %v1426
    %1439 = vrot.lane.b32.xlu0 %v1417, 96
    %v1440 = vpop.permute.xlu0 %1439
    %s1442 = scalar_lea.vmem [#allocation14], 8
    %1443 = vst.msk [vmem:[%s1442] sm:$0xff] %vm222, %v1440
    %v1444 = vld [vmem:[#allocation3] sm:$0xff]
    %v1445 = vld [vmem:[#allocation3 + $0x8] sm:$0xff]
    %v1446 = vld [vmem:[#allocation3 + $0x10] sm:$0xff]
    %v1447 = vld [vmem:[#allocation3 + $0x18] sm:$0xff]
    %v1448 = vld [vmem:[#allocation3 + $0x20] sm:$0xff]
    %v1449 = vld [vmem:[#allocation3 + $0x28] sm:$0xff]
    %v1450 = vld [vmem:[#allocation3 + $0x30] sm:$0xff]
    %v1451 = vld [vmem:[#allocation3 + $0x38] sm:$0xff]
    %v1452 = vld [vmem:[#allocation11] sm:$0xff]
    %v1453 = vld [vmem:[#allocation11 + $0x8] sm:$0xff]
    %v1454 = vld [vmem:[#allocation11 + $0x10] sm:$0xff]
    %v1455 = vld [vmem:[#allocation11 + $0x18] sm:$0xff]
    %v1456 = vld [vmem:[%s10] sm:$0x1]
    %v1458 = vperm.slane %v1456, 0
    %v1461 = vsel %vm222, %v1444, 0
    %v1464 = vsel %vm222, %v1445, 0
    %v1467 = vsel %vm222, %v1446, 0
    %v1470 = vsel %vm222, %v1447, 0
    %v1473 = vsel %vm222, %v1448, 0
    %v1476 = vsel %vm222, %v1449, 0
    %v1479 = vsel %vm222, %v1450, 0
    %v1482 = vsel %vm222, %v1451, 0
    %1484 = vmatpush.msra.mxu0 0.0
    %1485 = vmatpush.msra.mxu0 0.0
    %1486 = vmatpush.msra.mxu0 0.0
    %1487 = vmatpush.msra.mxu0 0.0
    %1488 = vmatpush.msra.mxu0 0.0
    %1489 = vmatpush.msra.mxu0 0.0
    %1490 = vmatpush.msra.mxu0 0.0
    %1491 = vmatpush.msra.mxu0 0.0
    %1492 = vmatpush.msra.mxu0 0.0
    %1493 = vmatpush.msra.mxu0 0.0
    %1494 = vmatpush.msra.mxu0 0.0
    %1495 = vmatpush.msra.mxu0 0.0
    %1496 = vmatpush.msra.mxu0 %v1455
    %1497 = vmatpush.msra.mxu0 %v1454
    %1498 = vmatpush.msra.mxu0 %v1453
    %1499 = vmatpush.msra.mxu0 %v1452
    %1500 = vmatmul.f32.gmra.mxu0 %v1461
    %v1501 = vpop.f32.mrf.mxu0
    %v1502 = vadd.f32 %v1458, %v1501
    %1503 = vmatmul.f32.gmra.mxu0 %v1464
    %v1504 = vpop.f32.mrf.mxu0
    %v1505 = vadd.f32 %v1458, %v1504
    %1506 = vmatmul.f32.gmra.mxu0 %v1467
    %v1507 = vpop.f32.mrf.mxu0
    %v1508 = vadd.f32 %v1458, %v1507
    %1509 = vmatmul.f32.gmra.mxu0 %v1470
    %v1510 = vpop.f32.mrf.mxu0
    %v1511 = vadd.f32 %v1458, %v1510
    %1512 = vmatmul.f32.gmra.mxu0 %v1473
    %v1513 = vpop.f32.mrf.mxu0
    %v1514 = vadd.f32 %v1458, %v1513
    %1515 = vmatmul.f32.gmra.mxu0 %v1476
    %v1516 = vpop.f32.mrf.mxu0
    %v1517 = vadd.f32 %v1458, %v1516
    %1518 = vmatmul.f32.gmra.mxu0 %v1479
    %v1519 = vpop.f32.mrf.mxu0
    %v1520 = vadd.f32 %v1458, %v1519
    %1521 = vmatmul.f32.gmra.mxu0 %v1482
    %v1522 = vpop.f32.mrf.mxu0
    %v1523 = vadd.f32 %v1458, %v1522
    %1524 = vdwg.mxu0
    %vm1525 = vcmp.gt.f32.partialorder %v1502, 0.0
    %vm1526 = vcmp.gt.f32.partialorder %v1505, 0.0
    %vm1527 = vcmp.gt.f32.partialorder %v1508, 0.0
    %vm1528 = vcmp.gt.f32.partialorder %v1511, 0.0
    %vm1529 = vcmp.gt.f32.partialorder %v1514, 0.0
    %vm1530 = vcmp.gt.f32.partialorder %v1517, 0.0
    %vm1531 = vcmp.gt.f32.partialorder %v1520, 0.0
    %vm1532 = vcmp.gt.f32.partialorder %v1523, 0.0
    %v1533 = vmin.f32 %v1502, 0.0
    %v1534 = vmin.f32 %v1505, 0.0
    %v1535 = vmin.f32 %v1508, 0.0
    %v1536 = vmin.f32 %v1511, 0.0
    %v1537 = vmin.f32 %v1514, 0.0
    %v1538 = vmin.f32 %v1517, 0.0
    %v1539 = vmin.f32 %v1520, 0.0
    %v1540 = vmin.f32 %v1523, 0.0
    %v1541 = vmul.f32 %v1533, 1.442695
    %v1542 = vpow.pop %v1541
    %v1543 = vmul.f32 %v1534, 1.442695
    %v1544 = vpow.pop %v1543
    %v1545 = vmul.f32 %v1535, 1.442695
    %v1546 = vpow.pop %v1545
    %v1547 = vmul.f32 %v1536, 1.442695
    %v1548 = vpow.pop %v1547
    %v1549 = vmul.f32 %v1537, 1.442695
    %v1550 = vpow.pop %v1549
    %v1551 = vmul.f32 %v1538, 1.442695
    %v1552 = vpow.pop %v1551
    %v1553 = vmul.f32 %v1539, 1.442695
    %v1554 = vpow.pop %v1553
    %v1555 = vmul.f32 %v1540, 1.442695
    %v1556 = vpow.pop %v1555
    %v1557 = vsub.f32 %v1542, 1.0
    %v1558 = vsub.f32 %v1544, 1.0
    %v1559 = vsub.f32 %v1546, 1.0
    %v1560 = vsub.f32 %v1548, 1.0
    %v1561 = vsub.f32 %v1550, 1.0
    %v1562 = vsub.f32 %v1552, 1.0
    %v1563 = vsub.f32 %v1554, 1.0
    %v1564 = vsub.f32 %v1556, 1.0
    %v1565 = vsel %vm1525, %v1502, %v1557
    %v1566 = vsel %vm1526, %v1505, %v1558
    %v1567 = vsel %vm1527, %v1508, %v1559
    %v1568 = vsel %vm1528, %v1511, %v1560
    %v1569 = vsel %vm1529, %v1514, %v1561
    %v1570 = vsel %vm1530, %v1517, %v1562
    %v1571 = vsel %vm1531, %v1520, %v1563
    %v1572 = vsel %vm1532, %v1523, %v1564
    %v1573 = vld [vmem:[%s11] sm:$0x1]
    %v1575 = vperm.slane %v1573, 0
    %v1577 = vmul.f32 %v1565, %v1575
    %v1578 = vmul.f32 %v1566, %v1575
    %v1579 = vmul.f32 %v1567, %v1575
    %v1580 = vmul.f32 %v1568, %v1575
    %v1581 = vmul.f32 %v1569, %v1575
    %v1582 = vmul.f32 %v1570, %v1575
    %v1583 = vmul.f32 %v1571, %v1575
    %v1584 = vmul.f32 %v1572, %v1575
    %v1585 = vsel %vm222, %v1577, 0.0
    %1586 = vadd.xlane.f32.xlu0 %v1585
    %v1587 = vpop.xlane.xlu0 %1586
    %v1588 = vsel %vm222, %v1578, 0.0
    %1589 = vadd.xlane.f32.xlu0 %v1588
    %v1590 = vpop.xlane.xlu0 %1589
    %v1591 = vsel %vm222, %v1579, 0.0
    %1592 = vadd.xlane.f32.xlu0 %v1591
    %v1593 = vpop.xlane.xlu0 %1592
    %v1594 = vsel %vm222, %v1580, 0.0
    %1595 = vadd.xlane.f32.xlu0 %v1594
    %v1596 = vpop.xlane.xlu0 %1595
    %v1597 = vsel %vm222, %v1581, 0.0
    %1598 = vadd.xlane.f32.xlu0 %v1597
    %v1599 = vpop.xlane.xlu0 %1598
    %v1600 = vsel %vm222, %v1582, 0.0
    %1601 = vadd.xlane.f32.xlu0 %v1600
    %v1602 = vpop.xlane.xlu0 %1601
    %v1603 = vsel %vm222, %v1583, 0.0
    %1604 = vadd.xlane.f32.xlu0 %v1603
    %v1605 = vpop.xlane.xlu0 %1604
    %v1606 = vsel %vm222, %v1584, 0.0
    %1607 = vadd.xlane.f32.xlu0 %v1606
    %v1608 = vpop.xlane.xlu0 %1607
    %v1609 = vld [vmem:[#allocation4] sm:$0x1]
    %v1611 = vperm.slane %v1609, 0
    %v1613 = vadd.f32 %v1587, %v1611
    %v1614 = vadd.f32 %v1590, %v1611
    %v1615 = vadd.f32 %v1593, %v1611
    %v1616 = vadd.f32 %v1596, %v1611
    %v1617 = vadd.f32 %v1599, %v1611
    %v1618 = vadd.f32 %v1602, %v1611
    %v1619 = vadd.f32 %v1605, %v1611
    %v1620 = vadd.f32 %v1608, %v1611
    %vm1621 = vcmask 7168
    %1622 = vst.msk [vmem:[%s13] sm:$0xff] %vm1621, %v1613
    %1623 = vst.msk [vmem:[%s13 + $0x8] sm:$0xff] %vm1621, %v1614
    %1624 = vst.msk [vmem:[%s13 + $0x10] sm:$0xff] %vm1621, %v1615
    %1625 = vst.msk [vmem:[%s13 + $0x18] sm:$0xff] %vm1621, %v1616
    %1626 = vst.msk [vmem:[%s13 + $0x20] sm:$0xff] %vm1621, %v1617
    %1627 = vst.msk [vmem:[%s13 + $0x28] sm:$0xff] %vm1621, %v1618
    %1628 = vst.msk [vmem:[%s13 + $0x30] sm:$0xff] %vm1621, %v1619
    %1629 = vst.msk [vmem:[%s13 + $0x38] sm:$0xff] %vm1621, %v1620
    // Predicated region
    $region70: #{tpu_custom_call.1} parent=1 // pred_check
      _
    $region71: #{tpu_custom_call.1} parent=1 // pred_check_branch
      %1631 = sbr.rel (0) target = $region73
    $region72: #{tpu_custom_call.1} parent=1 // pred_region
      _
    $region73: #{tpu_custom_call.1} parent=1 // pred_fallthru
      _
    // Predicated region
    $region74: #{tpu_custom_call.1} parent=1 // pred_check
      _
    $region75: #{tpu_custom_call.1} parent=1 // pred_check_branch
      %1633 = sbr.rel (0) target = $region77
    $region76: #{tpu_custom_call.1} parent=1 // pred_region
      %1635 = vsyncadd [#allocation7], 0
      %s1636 = sshll.u32 [#allocation13], 4
      %s1637 = int_to_ptr.vmem [resolvable:$true] %s1636
      %s1638 = sshll.u32 %s14, 4
      %s1639 = int_to_ptr.hbm [resolvable:$true] %s1638
      %1644 = dma.vmem_to_hbm [thread:$0]  %s1637, 256, %s1639, [#allocation7], 128, 128, 8
    $region77: #{tpu_custom_call.1} parent=1 // pred_fallthru
      _
    // Predicated region
    $region78: #{tpu_custom_call.1} parent=1 // pred_check
      _
    $region79: #{tpu_custom_call.1} parent=1 // pred_check_branch
      %1646 = sbr.rel (0) target = $region81
    $region80: #{tpu_custom_call.1} parent=1 // pred_region
      %1648 = vsyncadd [#allocation15], 0
      %s1649 = sshll.u32 [#allocation14], 4
      %s1650 = int_to_ptr.vmem [resolvable:$true] %s1649
      %s1651 = sshll.u32 %s15, 4
      %s1652 = int_to_ptr.hbm [resolvable:$true] %s1651
      %1657 = dma.vmem_to_hbm [thread:$0]  %s1650, 256, %s1652, [#allocation15], 128, 128, 8
    $region81: #{tpu_custom_call.1} parent=1 // pred_fallthru
      _
    // Predicated region
    $region82: #{tpu_custom_call.1} parent=1 // pred_check
      _
    $region83: #{tpu_custom_call.1} parent=1 // pred_check_branch
      %1659 = sbr.rel (0) target = $region85
    $region84: #{tpu_custom_call.1} parent=1 // pred_region
      _
    $region85: #{tpu_custom_call.1} parent=1 // pred_fallthru
      _
    // Predicated region
    $region86: #{tpu_custom_call.1} parent=1 // pred_check
      _
    $region87: #{tpu_custom_call.1} parent=1 // pred_check_branch
      %1661 = sbr.rel (0) target = $region89
    $region88: #{tpu_custom_call.1} parent=1 // pred_region
      %1663 = dma.done [#allocation7], 256
    $region89: #{tpu_custom_call.1} parent=1 // pred_fallthru
      _
    // Predicated region
    $region90: #{tpu_custom_call.1} parent=1 // pred_check
      _
    $region91: #{tpu_custom_call.1} parent=1 // pred_check_branch
      %1665 = sbr.rel (0) target = $region93
    $region92: #{tpu_custom_call.1} parent=1 // pred_region
      %1667 = dma.done [#allocation15], 256
    $region93: #{tpu_custom_call.1} parent=1 // pred_fallthru
      _
    %1668 = vsyncpa [#allocation6], 1
    %1669 = vsyncpa [#allocation9], 1
    %1670 = vsyncpa [#allocation12], 1
    %1671 = vsyncpa [#allocation7], 1
    %1672 = vsyncpa [#allocation15], 1

</llo_original>
